<compile_context>
chip_gen: v7x
topology: tpu7x:2x2x1
jax: 0.10.0
libtpu: 0.0.40
codegen_flags: <defaults>
</compile_context>

<pallas_src>
import functools

import jax
import jax.numpy as jnp
from jax.experimental import pallas as pl
from jax.experimental.pallas import tpu as pltpu

IN_FEATURES = 32100
OUT_FEATURES = 768

TK = 2048   # reduction (in_features) tile — 16 grid steps over K
TN = 384    # output-column tile — 2 parallel blocks (megacore split on v7x)


def _linear_kernel(x_ref, w_ref, b_ref, o_ref):
    """grid = (N//tn parallel, K//tk reduction).  Output block is resident over k."""
    k = pl.program_id(1)

    @pl.when(k == 0)
    def _():
        # Initialize the resident output block with the bias (f32).
        o_ref[...] = jnp.broadcast_to(b_ref[...], o_ref.shape).astype(o_ref.dtype)

    # Cast x to the weight's dtype (no-op for f32, enables bf16-streamed weights);
    # accumulation is always f32 directly in the output block.
    o_ref[...] += jnp.dot(
        x_ref[...].astype(w_ref.dtype),
        w_ref[...],
        preferred_element_type=jnp.float32,
    )


def prepare_params(w, b, *, tk=TK, weight_dtype=jnp.float32):
    """One-time prep (outside the per-call path): transpose W and zero-pad K.

    w: (out_features, in_features) PyTorch layout;  b: (out_features,)
    Returns (w_t_padded [K_pad, N], b_row [1, N]).
    Pass weight_dtype=jnp.bfloat16 to halve weight HBM traffic (inference).
    """
    N, K = w.shape
    K_pad = pl.cdiv(K, tk) * tk
    w_t = jnp.asarray(w, weight_dtype).T            # (K, N)
    if K_pad != K:
        w_t = jnp.pad(w_t, ((0, K_pad - K), (0, 0)))
    b_row = jnp.asarray(b, jnp.float32).reshape(1, N)
    return w_t, b_row


@functools.partial(jax.jit, static_argnames=("tk", "tn"))
def pallas_linear(x, w_t_padded, b_row, *, tk=TK, tn=TN):
    """y = x @ W.T + b.   x: [M, K] (K = 32100), w_t_padded: [K_pad, N], b_row: [1, N]."""
    M, K = x.shape
    K_pad, N = w_t_padded.shape
    assert K_pad % tk == 0 and N % tn == 0 and K_pad >= K

    # Only the tiny x tail is padded inside the jit (M x (K_pad - K) zeros);
    # zero-padding the reduction axis is mathematically a no-op.
    if K_pad != K:
        x = jnp.pad(x, ((0, 0), (0, K_pad - K)))

    grid = (N // tn, K_pad // tk)   # reduction axis last

    cost = pl.CostEstimate(
        flops=2 * M * K_pad * N,
        transcendentals=0,
        bytes_accessed=(
            w_t_padded.size * w_t_padded.dtype.itemsize   # dominant: the weight
            + M * K_pad * x.dtype.itemsize
            + M * N * 4
            + N * 4
        ),
    )

    return pl.pallas_call(
        _linear_kernel,
        out_shape=jax.ShapeDtypeStruct((M, N), jnp.float32),
        grid_spec=pltpu.PrefetchScalarGridSpec(
            num_scalar_prefetch=0,
            grid=grid,
            in_specs=[
                pl.BlockSpec((M, tk), lambda n, k: (0, k)),    # x tile (re-read per n: ~1 MB, negligible)
                pl.BlockSpec((tk, tn), lambda n, k: (k, n)),   # W^T tile (each element streamed once)
                pl.BlockSpec((1, tn), lambda n, k: (0, n)),    # bias column block
            ],
            out_specs=pl.BlockSpec((M, tn), lambda n, k: (0, n)),  # resident over k
        ),
        compiler_params=pltpu.CompilerParams(
            dimension_semantics=("parallel", "arbitrary"),
            # 2x double-buffered W tiles (6 MB) + x tiles + output: safely covered
            # on v5e/v6e/v7x; explicit so the compiler never shrinks pipelining.
            vmem_limit_bytes=32 * 1024 * 1024,
        ),
        cost_estimate=cost,
    )(x, w_t_padded, b_row)


def init_params(key):
    """Deterministic PyTorch-style Linear init: U(-1/sqrt(in), 1/sqrt(in))."""
    k_w, k_b = jax.random.split(key)
    bound = 1.0 / jnp.sqrt(jnp.float32(IN_FEATURES))
    w = jax.random.uniform(
        k_w, (OUT_FEATURES, IN_FEATURES), jnp.float32, -bound, bound
    )
    b = jax.random.uniform(k_b, (OUT_FEATURES,), jnp.float32, -bound, bound)
    return w, b


if __name__ == "__main__":
    key = jax.random.PRNGKey(0)
    k_x, k_p = jax.random.split(key)

    batch = 8
    x = jax.random.normal(k_x, (batch, IN_FEATURES), jnp.float32)
    w, b = init_params(k_p)

    # One-time weight prep (transpose + K pad) — NOT on the per-call path.
    # For inference-style deployments, weight_dtype=jnp.bfloat16 halves HBM traffic.
    w_t_padded, b_row = prepare_params(w, b)

    y = pallas_linear(x, w_t_padded, b_row)
    jax.block_until_ready(y)

    # Reference check against plain JAX (same math as PyTorch's Linear).
    y_ref = x @ w.T + b
    assert y.shape == (batch, OUT_FEATURES)
    assert jnp.allclose(y, y_ref, atol=2e-3, rtol=2e-3)

    print("KERNEL_OK")
</pallas_src>

<mosaic_0001>
module attributes {stable_mosaic.version = 11 : i64} {
  func.func @_linear_kernel(%arg0: i32, %arg1: i32, %arg2: memref<8x2048xf32, #tpu.memory_space<vmem>>, %arg3: memref<2048x384xf32, #tpu.memory_space<vmem>>, %arg4: memref<1x384xf32, #tpu.memory_space<vmem>>, %arg5: memref<8x384xf32, #tpu.memory_space<vmem>>) attributes {dimension_semantics = [#tpu.dimension_semantics<parallel>, #tpu.dimension_semantics<arbitrary>], iteration_bounds = array<i64: 2, 16>, scalar_prefetch = 0 : i64, scratch_operands = 0 : i64, tpu.core_type = #tpu.core_type<tc>, window_params = [{transform_indices = @transform_0, window_bounds = array<i64: 8, 2048>}, {transform_indices = @transform_1, window_bounds = array<i64: 2048, 384>}, {transform_indices = @transform_2, window_bounds = array<i64: 1, 384>}, {transform_indices = @transform_3, window_bounds = array<i64: 8, 384>}]} {
    %c0_i32 = arith.constant 0 : i32
    %0 = arith.cmpi eq, %arg1, %c0_i32 : i32
    %1 = arith.extui %0 : i1 to i32
    %c0_i32_0 = arith.constant 0 : i32
    %2 = arith.cmpi ne, %1, %c0_i32_0 : i32
    scf.if %2 {
      %c0_8 = arith.constant 0 : index
      %c0_9 = arith.constant 0 : index
      %9 = vector.load %arg4[%c0_8, %c0_9] : memref<1x384xf32, #tpu.memory_space<vmem>>, vector<1x384xf32>
      %10 = vector.shape_cast %9 : vector<1x384xf32> to vector<1x384xf32>
      %11 = vector.broadcast %10 : vector<1x384xf32> to vector<8x384xf32>
      %c0_10 = arith.constant 0 : index
      %c0_11 = arith.constant 0 : index
      %12 = vector.load %arg5[%c0_10, %c0_11] : memref<8x384xf32, #tpu.memory_space<vmem>>, vector<8x384xf32>
      tpu.vector_store %arg5[%c0_10, %c0_11], %11 {strides = array<i32>} : memref<8x384xf32, #tpu.memory_space<vmem>>, vector<8x384xf32>,
    } else {
    }
    %c0 = arith.constant 0 : index
    %c0_1 = arith.constant 0 : index
    %3 = vector.load %arg5[%c0, %c0_1] : memref<8x384xf32, #tpu.memory_space<vmem>>, vector<8x384xf32>
    %c0_2 = arith.constant 0 : index
    %c0_3 = arith.constant 0 : index
    %4 = vector.load %arg2[%c0_2, %c0_3] : memref<8x2048xf32, #tpu.memory_space<vmem>>, vector<8x2048xf32>
    %c0_4 = arith.constant 0 : index
    %c0_5 = arith.constant 0 : index
    %5 = vector.load %arg3[%c0_4, %c0_5] : memref<2048x384xf32, #tpu.memory_space<vmem>>, vector<2048x384xf32>
    %cst = arith.constant dense<0.000000e+00> : vector<8x384xf32>
    %6 = tpu.matmul %4, %5, %cst {dimension_numbers = #tpu.dot_dimension_numbers<[1], [0], [0], [1], [0, 0, 1, 1], [], []>} : vector<8x2048xf32>, vector<2048x384xf32>, vector<8x384xf32> -> vector<8x384xf32>
    %7 = arith.addf %3, %6 : vector<8x384xf32>
    %c0_6 = arith.constant 0 : index
    %c0_7 = arith.constant 0 : index
    %8 = vector.load %arg5[%c0_6, %c0_7] : memref<8x384xf32, #tpu.memory_space<vmem>>, vector<8x384xf32>
    tpu.vector_store %arg5[%c0_6, %c0_7], %7 {strides = array<i32>} : memref<8x384xf32, #tpu.memory_space<vmem>>, vector<8x384xf32>,
    return
  }
  func.func @transform_0(%arg0: i32, %arg1: i32) -> (i32, i32) {
    %c0_i32 = arith.constant 0 : i32
    %c0_i32_0 = arith.constant 0 : i32
    return %c0_i32, %arg1 : i32, i32
  }
  func.func @transform_1(%arg0: i32, %arg1: i32) -> (i32, i32) {
    %c0_i32 = arith.constant 0 : i32
    return %arg1, %arg0 : i32, i32
  }
  func.func @transform_2(%arg0: i32, %arg1: i32) -> (i32, i32) {
    %c0_i32 = arith.constant 0 : i32
    %c0_i32_0 = arith.constant 0 : i32
    return %c0_i32, %arg0 : i32, i32
  }
  func.func @transform_3(%arg0: i32, %arg1: i32) -> (i32, i32) {
    %c0_i32 = arith.constant 0 : i32
    %c0_i32_0 = arith.constant 0 : i32
    return %c0_i32, %arg0 : i32, i32
  }
}

</mosaic_0001>

<llo_original>
// kernel: pallas_linear.1
$region0: #{pallas_linear.1}
  #allocation0 [shape = 'u32[]', space=smem, size = 0x4, offset = 0x4, fixed_abs, tag = 'smem constant byte address 0x4 - core index']
  #allocation1 [shape = 'u32[144,128]{1,0:T(1,128)}', space=vmem, size = 0x12000, scoped, tag = 'internal scratch']
  %s0 = inlined_call_operand.vmem [shape: f32[8,32768], index: 0, kind: input, shape index: {}]
  %s1 = inlined_call_operand.hbm [shape: f32[32768,768], index: 1, kind: input, shape index: {}]
  %s2 = inlined_call_operand.hbm [shape: f32[1,768], index: 2, kind: input, shape index: {}]
  %s3 = inlined_call_operand.hbm [shape: f32[8,768], index: 3, kind: output, shape index: {}]
  %s4 = sld [smem:[#allocation0]]
  $region57: #{pallas_linear.1} parent=0
    _
  %s6 = ssub.s32 1, %s4
  %s7 = scalar_select 0, %s6, %s4
  $region1: #{pallas_linear.1} parent=0
    #allocation2 [shape = 'u8[6291456]{0}', space=vmem, size = 0x600000, scoped, tag = 'input window, operand 1']
    #allocation3 [shape = 's32[2]{0}', space=sflag, size = 0x8, scoped, tag = 'scoped memory for pallas_linear.1']
    #allocation4 [shape = 's32[2]{0}', space=sflag, size = 0x8, scoped, tag = 'scoped memory for pallas_linear.1']
    #allocation5 [shape = 'u8[3072]{0}', space=vmem, size = 0xc00, scoped, tag = 'input window, operand 2']
    #allocation6 [shape = 's32[2]{0}', space=sflag, size = 0x8, scoped, tag = 'scoped memory for pallas_linear.1']
    #allocation7 [shape = 'u8[24576]{0}', space=vmem, size = 0x6000, scoped, tag = 'output window, operand 0']
    %8 = vsyncpa [#allocation3], 0
    %s9 = scalar_lea.sflag [#allocation3], 1
    %10 = vsyncpa %s9, 0
    %11 = vsyncpa [#allocation6], 0
    %s12 = scalar_lea.sflag [#allocation6], 1
    %13 = vsyncpa %s12, 0
    %14 = vsyncpa [#allocation4], 0
    %s15 = scalar_lea.sflag [#allocation4], 1
    %16 = vsyncpa %s15, 0
    loop: start=0, step=1, limit=34
    $region2: #{pallas_linear.1} parent=1 // loop_pre_header
      _
    $region3: #{pallas_linear.1} parent=1 // loop_header
      %s18 = sphi 0, %s22
      %p19 = scmp.ge.s32.totalorder %s18, 34
      %s25 = sphi 0, %s37
      %s26 = sphi 0, %s33
      %s27 = sphi 0, %s25
      %s28 = sphi 0, %s26
      %s29 = sphi 0, %s27
      %s30 = sphi 0, %s28
      %s40 = sphi 0, %s42
      %s43 = sphi 0, %s40
      %s44 = sphi 0, %s43
      %s60 = sphi 0, %s44
      %s68 = sphi 0, %s70
      %s71 = sphi 0, %s68
      %s72 = sphi 0, %s71
      %s88 = sphi 0, %s72
      %s94 = sphi 0, %s96
      %s97 = sphi 0, %s94
      %s98 = sphi 0, %s97
      %s114 = sphi 0, %s98
      %s120 = sphi 0, %s122
      %s123 = sphi 0, %s120
      %s124 = sphi 0, %s123
      %s140 = sphi 0, %s124
    $region4: #{pallas_linear.1} parent=1 // loop_header_branch
      %21 = sbr.rel (%p19) target = $region8
    $region5: #{pallas_linear.1} parent=1 // loop_body
      %s23 = ssub.s32 %s18, 1
      %s24 = ssub.s32 %s18, 2
      %s31 = sadd.s32 1, %s26
      %p32 = scmp.ge.s32.totalorder %s31, 16
      %s33 = scalar_select %p32, 0, %s31
      %s34 = sadd.s32 1, %s25
      %s35 = scalar_select %p32, %s34, %s25
      %p36 = scmp.ge.s32.totalorder %s35, 2
      %s37 = scalar_select %p36, 0, %s35
      %s38 = ssub.s32 %s26, %s33
      %p39 = scmp.eq.s32.totalorder %s38, 0
      %s41 = sadd.s32 %s40, 1
      %s42 = scalar_select %p39, %s40, %s41
      %p45 = pneg %p39
      %p46 = scmp.eq.s32.totalorder %s18, 31
      %p47 = por %p45, %p46
      %p48 = scmp.ne.s32.totalorder %s40, %s43
      %p49 = scmp.eq.s32.totalorder %s18, 0
      %p50 = por %p48, %p49
      %p51 = scmp.ne.s32.totalorder %s40, %s43
      %p52 = scmp.eq.s32.totalorder %s23, 31
      %p53 = por %p51, %p52
      %p54 = scmp.ne.s32.totalorder %s43, %s44
      %p55 = scmp.eq.s32.totalorder %s23, 0
      %p56 = por %p54, %p55
      %p57 = scmp.ne.s32.totalorder %s43, %s44
      %p58 = scmp.eq.s32.totalorder %s24, 31
      %p59 = por %p57, %p58
      %p61 = scmp.ne.s32.totalorder %s44, %s60
      %p62 = scmp.eq.s32.totalorder %s24, 0
      %p63 = por %p61, %p62
      %s64 = ssub.s32 %s26, %s33
      %s65 = ssub.s32 %s25, %s37
      %s66 = sor.u32 %s64, %s65
      %p67 = scmp.eq.s32.totalorder %s66, 0
      %s69 = sadd.s32 %s68, 1
      %s70 = scalar_select %p67, %s68, %s69
      %p73 = pneg %p67
      %p74 = scmp.eq.s32.totalorder %s18, 31
      %p75 = por %p73, %p74
      %p76 = scmp.ne.s32.totalorder %s68, %s71
      %p77 = scmp.eq.s32.totalorder %s18, 0
      %p78 = por %p76, %p77
      %p79 = scmp.ne.s32.totalorder %s68, %s71
      %p80 = scmp.eq.s32.totalorder %s23, 31
      %p81 = por %p79, %p80
      %p82 = scmp.ne.s32.totalorder %s71, %s72
      %p83 = scmp.eq.s32.totalorder %s23, 0
      %p84 = por %p82, %p83
      %p85 = scmp.ne.s32.totalorder %s71, %s72
      %p86 = scmp.eq.s32.totalorder %s24, 31
      %p87 = por %p85, %p86
      %p89 = scmp.ne.s32.totalorder %s72, %s88
      %p90 = scmp.eq.s32.totalorder %s24, 0
      %p91 = por %p89, %p90
      %s92 = ssub.s32 %s25, %s37
      %p93 = scmp.eq.s32.totalorder %s92, 0
      %s95 = sadd.s32 %s94, 1
      %s96 = scalar_select %p93, %s94, %s95
      %p99 = pneg %p93
      %p100 = scmp.eq.s32.totalorder %s18, 31
      %p101 = por %p99, %p100
      %p102 = scmp.ne.s32.totalorder %s94, %s97
      %p103 = scmp.eq.s32.totalorder %s18, 0
      %p104 = por %p102, %p103
      %p105 = scmp.ne.s32.totalorder %s94, %s97
      %p106 = scmp.eq.s32.totalorder %s23, 31
      %p107 = por %p105, %p106
      %p108 = scmp.ne.s32.totalorder %s97, %s98
      %p109 = scmp.eq.s32.totalorder %s23, 0
      %p110 = por %p108, %p109
      %p111 = scmp.ne.s32.totalorder %s97, %s98
      %p112 = scmp.eq.s32.totalorder %s24, 31
      %p113 = por %p111, %p112
      %p115 = scmp.ne.s32.totalorder %s98, %s114
      %p116 = scmp.eq.s32.totalorder %s24, 0
      %p117 = por %p115, %p116
      %s118 = ssub.s32 %s25, %s37
      %p119 = scmp.eq.s32.totalorder %s118, 0
      %s121 = sadd.s32 %s120, 1
      %s122 = scalar_select %p119, %s120, %s121
      %p125 = pneg %p119
      %p126 = scmp.eq.s32.totalorder %s18, 31
      %p127 = por %p125, %p126
      %p128 = scmp.ne.s32.totalorder %s120, %s123
      %p129 = scmp.eq.s32.totalorder %s18, 0
      %p130 = por %p128, %p129
      %p131 = scmp.ne.s32.totalorder %s120, %s123
      %p132 = scmp.eq.s32.totalorder %s23, 31
      %p133 = por %p131, %p132
      %p134 = scmp.ne.s32.totalorder %s123, %s124
      %p135 = scmp.eq.s32.totalorder %s23, 0
      %p136 = por %p134, %p135
      %p137 = scmp.ne.s32.totalorder %s123, %s124
      %p138 = scmp.eq.s32.totalorder %s24, 31
      %p139 = por %p137, %p138
      %p141 = scmp.ne.s32.totalorder %s124, %s140
      %p142 = scmp.eq.s32.totalorder %s24, 0
      %p143 = por %p141, %p142
      %p144 = scmp.le.s32.totalorder 1, %s18
      %p145 = scmp.lt.s32.totalorder %s18, 33
      %p146 = pnand %p144, %p145
      %p147 = pneg %p146
      // Predicated region
      $region9: #{pallas_linear.1} parent=5 // pred_check
        _
      $region10: #{pallas_linear.1} parent=5 // pred_check_branch
        %149 = sbr.rel (%p146) target = $region12
      $region11: #{pallas_linear.1} parent=5 // pred_region
        %s150 = ssub.s32 %s18, 1
      $region12: #{pallas_linear.1} parent=5 // pred_fallthru
        _
      %p151 = scmp.lt.s32.totalorder %s18, 32
      // Predicated region
      $region13: #{pallas_linear.1} parent=5 // pred_check
        %p152 = pneg %p151
      $region14: #{pallas_linear.1} parent=5 // pred_check_branch
        %154 = sbr.rel (%p152) target = $region16
      $region15: #{pallas_linear.1} parent=5 // pred_region
        // Predicated region
        $region17: #{pallas_linear.1} parent=15 // pred_check
          %p155 = pneg %p50
        $region18: #{pallas_linear.1} parent=15 // pred_check_branch
          %157 = sbr.rel (%p155) target = $region20
        $region19: #{pallas_linear.1} parent=15 // pred_region
          %s158 = smul.u32 16, %s26
          %p159 = scmp.lt.s32.totalorder %s158, 255
          %s160 = scalar_select %p159, %s158, 255
          %s161 = smul.addr %s160, 8
          %s162 = scalar_lea.vmem %s0, %s161
          %s163 = smul.u32 16, %s26
        $region20: #{pallas_linear.1} parent=15 // pred_fallthru
          _
        // Predicated region
        $region21: #{pallas_linear.1} parent=15 // pred_check
          %p164 = pneg %p78
        $region22: #{pallas_linear.1} parent=15 // pred_check_branch
          %166 = sbr.rel (%p164) target = $region24
        $region23: #{pallas_linear.1} parent=15 // pred_region
          %s167 = sand.u32 %s68, 1
          %s168 = scalar_lea.sflag [#allocation3], %s167
          %s169 = sand.u32 %s68, 1
          %s170 = smul.addr %s169, 6144
          %s171 = scalar_lea.vmem [#allocation2], %s170
          %s172 = smul.u32 256, %s26
          %s173 = smul.u32 3, %s25
          %s175 = ssub.s32 98304, 98304
          %176 = vsyncadd %s168, %s175
          %s177 = smul.addr %s172, 6
          %s178 = sadd.s32 %s173, %s177
          %s179 = smul.addr %s178, 128
          %s180 = scalar_lea.hbm %s1, %s179
          %s181 = sshll.u32 %s171, 4
          %s182 = int_to_ptr.vmem [resolvable:$true] %s181
          %187 = dma.hbm_to_vmem [thread:$0]  %s180, 98304, %s182, %s168, 768, 384, 24
        $region24: #{pallas_linear.1} parent=15 // pred_fallthru
          _
        // Predicated region
        $region25: #{pallas_linear.1} parent=15 // pred_check
          %p188 = pneg %p104
        $region26: #{pallas_linear.1} parent=15 // pred_check_branch
          %190 = sbr.rel (%p188) target = $region28
        $region27: #{pallas_linear.1} parent=15 // pred_region
          %s191 = sand.u32 %s94, 1
          %s192 = scalar_lea.sflag [#allocation6], %s191
          %s193 = sand.u32 %s94, 1
          %s194 = smul.addr %s193, 3
          %s195 = scalar_lea.vmem [#allocation5], %s194
          %s196 = smul.u32 3, %s25
          %s198 = ssub.s32 48, 48
          %199 = vsyncadd %s192, %s198
          %s200 = smul.addr %s196, 16
          %s201 = scalar_lea.hbm %s2, %s200
          %s203 = sshll.u32 %s195, 4
          %s204 = int_to_ptr.vmem [resolvable:$true] %s203
          %206 = dma.hbm_to_vmem [thread:$0]  %s201, 48, %s204, %s192
        $region28: #{pallas_linear.1} parent=15 // pred_fallthru
          _
      $region16: #{pallas_linear.1} parent=5 // pred_fallthru
        _
      %p207 = scmp.le.s32.totalorder 1, %s18
      %p208 = scmp.lt.s32.totalorder %s18, 33
      %p209 = pnand %p207, %p208
      %p210 = pneg %p209
      // Predicated region
      $region29: #{pallas_linear.1} parent=5 // pred_check
        _
      $region30: #{pallas_linear.1} parent=5 // pred_check_branch
        %212 = sbr.rel (%p209) target = $region32
      $region31: #{pallas_linear.1} parent=5 // pred_region
        %s213 = ssub.s32 %s18, 1
        %s214 = sand.u32 %s71, 1
        %s215 = scalar_lea.sflag [#allocation3], %s214
        %s216 = sand.u32 %s71, 1
        %s217 = smul.addr %s216, 6144
        %s218 = scalar_lea.vmem [#allocation2], %s217
        // Predicated region
        $region33: #{pallas_linear.1} parent=31 // pred_check
          %p219 = pneg %p84
        $region34: #{pallas_linear.1} parent=31 // pred_check_branch
          %221 = sbr.rel (%p219) target = $region36
        $region35: #{pallas_linear.1} parent=31 // pred_region
          %222 = dma.done %s215, 98304
        $region36: #{pallas_linear.1} parent=31 // pred_fallthru
          _
        %s223 = sand.u32 %s97, 1
        %s224 = scalar_lea.sflag [#allocation6], %s223
        %s225 = sand.u32 %s97, 1
        %s226 = smul.addr %s225, 3
        %s227 = scalar_lea.vmem [#allocation5], %s226
        // Predicated region
        $region37: #{pallas_linear.1} parent=31 // pred_check
          %p228 = pneg %p110
        $region38: #{pallas_linear.1} parent=31 // pred_check_branch
          %230 = sbr.rel (%p228) target = $region40
        $region39: #{pallas_linear.1} parent=31 // pred_region
          %231 = dma.done %s224, 48
        $region40: #{pallas_linear.1} parent=31 // pred_fallthru
          _
        %s232 = smul.u32 16, %s28
        %p233 = scmp.lt.s32.totalorder %s232, 255
        %s234 = scalar_select %p233, %s232, 255
        %s235 = smul.addr %s234, 8
        %s236 = scalar_lea.vmem %s0, %s235
        %p237 = pneg %p56
        %p238 = pneg %p53
        %s239 = sand.u32 %s71, 1
        %s240 = scalar_lea.sflag [#allocation3], %s239
        %s241 = sand.u32 %s71, 1
        %s242 = smul.addr %s241, 6144
        %s243 = scalar_lea.vmem [#allocation2], %s242
        %p244 = pneg %p84
        %p245 = pneg %p81
        %s246 = sand.u32 %s97, 1
        %s247 = scalar_lea.sflag [#allocation6], %s246
        %s248 = sand.u32 %s97, 1
        %s249 = smul.addr %s248, 3
        %s250 = scalar_lea.vmem [#allocation5], %s249
        %p251 = pneg %p110
        %p252 = pneg %p107
        %p253 = pneg %p136
        %p254 = pneg %p133
        %s255 = sand.u32 %s123, 1
        %s256 = scalar_lea.sflag [#allocation4], %s255
        %s257 = sand.u32 %s123, 1
        %s258 = smul.addr %s257, 24
        %s259 = scalar_lea.vmem [#allocation7], %s258
        %s260 = smul.u32 16, %s28
        %p261 = scmp.lt.s32.totalorder %s260, 255
        %s262 = scalar_select %p261, %s260, 255
        %s263 = smul.addr %s262, 8
        %s264 = scalar_lea.vmem %s0, %s263
        %s265 = smul.u32 16, %s28
        %s266 = smul.u32 256, %s28
        %s267 = smul.u32 3, %s27
        %s268 = smul.u32 3, %s27
        %s269 = smul.u32 3, %s27
        %p270 = scmp.eq.s32.totalorder %s28, 0
        // Predicated region
        $region41: #{pallas_linear.1} parent=31 // pred_check
          %p271 = pneg %p270
        $region42: #{pallas_linear.1} parent=31 // pred_check_branch
          %273 = sbr.rel (%p271) target = $region44
        $region43: #{pallas_linear.1} parent=31 // pred_region
          %v274 = vld [vmem:[%s227] sm:$0x7]
          %v276 = vlaneseq
          %v277 = vshrl.u32 %v276, 7
          %v278 = vsub.s32 0, %v277
          %v279 = vrot.slane %v274, %v278
          %v280 = vlaneseq
          %v281 = vshrl.u32 %v280, 7
          %v282 = vsub.s32 1, %v281
          %v283 = vrot.slane %v274, %v282
          %v284 = vlaneseq
          %v285 = vshrl.u32 %v284, 7
          %v286 = vsub.s32 2, %v285
          %v287 = vrot.slane %v274, %v286
          %291 = vst [vmem:[%s259] sm:$0xff] %v279
          %292 = vst [vmem:[%s259 + $0x8] sm:$0xff] %v283
          %293 = vst [vmem:[%s259 + $0x10] sm:$0xff] %v287
        $region44: #{pallas_linear.1} parent=31 // pred_fallthru
          _
        %v294 = vld [vmem:[%s259] sm:$0xff]
        %v295 = vld [vmem:[%s259 + $0x8] sm:$0xff]
        %v296 = vld [vmem:[%s259 + $0x10] sm:$0xff]
        %v297 = vld [vmem:[%s264] sm:$0xff]
        %v298 = vld [vmem:[%s264 + $0x8] sm:$0xff]
        %v299 = vld [vmem:[%s264 + $0x10] sm:$0xff]
        %v300 = vld [vmem:[%s264 + $0x18] sm:$0xff]
        %v301 = vld [vmem:[%s264 + $0x20] sm:$0xff]
        %v302 = vld [vmem:[%s264 + $0x28] sm:$0xff]
        %v303 = vld [vmem:[%s264 + $0x30] sm:$0xff]
        %v304 = vld [vmem:[%s264 + $0x38] sm:$0xff]
        %v305 = vld [vmem:[%s264 + $0x40] sm:$0xff]
        %v306 = vld [vmem:[%s264 + $0x48] sm:$0xff]
        %v307 = vld [vmem:[%s264 + $0x50] sm:$0xff]
        %v308 = vld [vmem:[%s264 + $0x58] sm:$0xff]
        %v309 = vld [vmem:[%s264 + $0x60] sm:$0xff]
        %v310 = vld [vmem:[%s264 + $0x68] sm:$0xff]
        %v311 = vld [vmem:[%s264 + $0x70] sm:$0xff]
        %v312 = vld [vmem:[%s264 + $0x78] sm:$0xff]
        %v313 = vld [vmem:[%s218] sm:$0xff]
        %v314 = vld [vmem:[%s218 + $0x8] sm:$0xff]
        %v315 = vld [vmem:[%s218 + $0x10] sm:$0xff]
        %v316 = vld [vmem:[%s218 + $0x18] sm:$0xff]
        %v317 = vld [vmem:[%s218 + $0x20] sm:$0xff]
        %v318 = vld [vmem:[%s218 + $0x28] sm:$0xff]
        %v319 = vld [vmem:[%s218 + $0x30] sm:$0xff]
        %v320 = vld [vmem:[%s218 + $0x38] sm:$0xff]
        %v321 = vld [vmem:[%s218 + $0x40] sm:$0xff]
        %v322 = vld [vmem:[%s218 + $0x48] sm:$0xff]
        %v323 = vld [vmem:[%s218 + $0x50] sm:$0xff]
        %v324 = vld [vmem:[%s218 + $0x58] sm:$0xff]
        %v325 = vld [vmem:[%s218 + $0x60] sm:$0xff]
        %v326 = vld [vmem:[%s218 + $0x68] sm:$0xff]
        %v327 = vld [vmem:[%s218 + $0x70] sm:$0xff]
        %v328 = vld [vmem:[%s218 + $0x78] sm:$0xff]
        %v329 = vld [vmem:[%s218 + $0x80] sm:$0xff]
        %v330 = vld [vmem:[%s218 + $0x88] sm:$0xff]
        %v331 = vld [vmem:[%s218 + $0x90] sm:$0xff]
        %v332 = vld [vmem:[%s218 + $0x98] sm:$0xff]
        %v333 = vld [vmem:[%s218 + $0xa0] sm:$0xff]
        %v334 = vld [vmem:[%s218 + $0xa8] sm:$0xff]
        %v335 = vld [vmem:[%s218 + $0xb0] sm:$0xff]
        %v336 = vld [vmem:[%s218 + $0xb8] sm:$0xff]
        %v337 = vld [vmem:[%s218 + $0xc0] sm:$0xff]
        %v338 = vld [vmem:[%s218 + $0xc8] sm:$0xff]
        %v339 = vld [vmem:[%s218 + $0xd0] sm:$0xff]
        %v340 = vld [vmem:[%s218 + $0xd8] sm:$0xff]
        %v341 = vld [vmem:[%s218 + $0xe0] sm:$0xff]
        %v342 = vld [vmem:[%s218 + $0xe8] sm:$0xff]
        %v343 = vld [vmem:[%s218 + $0xf0] sm:$0xff]
        %v344 = vld [vmem:[%s218 + $0xf8] sm:$0xff]
        %v345 = vld [vmem:[%s218 + $0x100] sm:$0xff]
        %v346 = vld [vmem:[%s218 + $0x108] sm:$0xff]
        %v347 = vld [vmem:[%s218 + $0x110] sm:$0xff]
        %v348 = vld [vmem:[%s218 + $0x118] sm:$0xff]
        %v349 = vld [vmem:[%s218 + $0x120] sm:$0xff]
        %v350 = vld [vmem:[%s218 + $0x128] sm:$0xff]
        %v351 = vld [vmem:[%s218 + $0x130] sm:$0xff]
        %v352 = vld [vmem:[%s218 + $0x138] sm:$0xff]
        %v353 = vld [vmem:[%s218 + $0x140] sm:$0xff]
        %v354 = vld [vmem:[%s218 + $0x148] sm:$0xff]
        %v355 = vld [vmem:[%s218 + $0x150] sm:$0xff]
        %v356 = vld [vmem:[%s218 + $0x158] sm:$0xff]
        %v357 = vld [vmem:[%s218 + $0x160] sm:$0xff]
        %v358 = vld [vmem:[%s218 + $0x168] sm:$0xff]
        %v359 = vld [vmem:[%s218 + $0x170] sm:$0xff]
        %v360 = vld [vmem:[%s218 + $0x178] sm:$0xff]
        %v361 = vld [vmem:[%s218 + $0x180] sm:$0xff]
        %v362 = vld [vmem:[%s218 + $0x188] sm:$0xff]
        %v363 = vld [vmem:[%s218 + $0x190] sm:$0xff]
        %v364 = vld [vmem:[%s218 + $0x198] sm:$0xff]
        %v365 = vld [vmem:[%s218 + $0x1a0] sm:$0xff]
        %v366 = vld [vmem:[%s218 + $0x1a8] sm:$0xff]
        %v367 = vld [vmem:[%s218 + $0x1b0] sm:$0xff]
        %v368 = vld [vmem:[%s218 + $0x1b8] sm:$0xff]
        %v369 = vld [vmem:[%s218 + $0x1c0] sm:$0xff]
        %v370 = vld [vmem:[%s218 + $0x1c8] sm:$0xff]
        %v371 = vld [vmem:[%s218 + $0x1d0] sm:$0xff]
        %v372 = vld [vmem:[%s218 + $0x1d8] sm:$0xff]
        %v373 = vld [vmem:[%s218 + $0x1e0] sm:$0xff]
        %v374 = vld [vmem:[%s218 + $0x1e8] sm:$0xff]
        %v375 = vld [vmem:[%s218 + $0x1f0] sm:$0xff]
        %v376 = vld [vmem:[%s218 + $0x1f8] sm:$0xff]
        %v377 = vld [vmem:[%s218 + $0x200] sm:$0xff]
        %v378 = vld [vmem:[%s218 + $0x208] sm:$0xff]
        %v379 = vld [vmem:[%s218 + $0x210] sm:$0xff]
        %v380 = vld [vmem:[%s218 + $0x218] sm:$0xff]
        %v381 = vld [vmem:[%s218 + $0x220] sm:$0xff]
        %v382 = vld [vmem:[%s218 + $0x228] sm:$0xff]
        %v383 = vld [vmem:[%s218 + $0x230] sm:$0xff]
        %v384 = vld [vmem:[%s218 + $0x238] sm:$0xff]
        %v385 = vld [vmem:[%s218 + $0x240] sm:$0xff]
        %v386 = vld [vmem:[%s218 + $0x248] sm:$0xff]
        %v387 = vld [vmem:[%s218 + $0x250] sm:$0xff]
        %v388 = vld [vmem:[%s218 + $0x258] sm:$0xff]
        %v389 = vld [vmem:[%s218 + $0x260] sm:$0xff]
        %v390 = vld [vmem:[%s218 + $0x268] sm:$0xff]
        %v391 = vld [vmem:[%s218 + $0x270] sm:$0xff]
        %v392 = vld [vmem:[%s218 + $0x278] sm:$0xff]
        %v393 = vld [vmem:[%s218 + $0x280] sm:$0xff]
        %v394 = vld [vmem:[%s218 + $0x288] sm:$0xff]
        %v395 = vld [vmem:[%s218 + $0x290] sm:$0xff]
        %v396 = vld [vmem:[%s218 + $0x298] sm:$0xff]
        %v397 = vld [vmem:[%s218 + $0x2a0] sm:$0xff]
        %v398 = vld [vmem:[%s218 + $0x2a8] sm:$0xff]
        %v399 = vld [vmem:[%s218 + $0x2b0] sm:$0xff]
        %v400 = vld [vmem:[%s218 + $0x2b8] sm:$0xff]
        %v401 = vld [vmem:[%s218 + $0x2c0] sm:$0xff]
        %v402 = vld [vmem:[%s218 + $0x2c8] sm:$0xff]
        %v403 = vld [vmem:[%s218 + $0x2d0] sm:$0xff]
        %v404 = vld [vmem:[%s218 + $0x2d8] sm:$0xff]
        %v405 = vld [vmem:[%s218 + $0x2e0] sm:$0xff]
        %v406 = vld [vmem:[%s218 + $0x2e8] sm:$0xff]
        %v407 = vld [vmem:[%s218 + $0x2f0] sm:$0xff]
        %v408 = vld [vmem:[%s218 + $0x2f8] sm:$0xff]
        %v409 = vld [vmem:[%s218 + $0x300] sm:$0xff]
        %v410 = vld [vmem:[%s218 + $0x308] sm:$0xff]
        %v411 = vld [vmem:[%s218 + $0x310] sm:$0xff]
        %v412 = vld [vmem:[%s218 + $0x318] sm:$0xff]
        %v413 = vld [vmem:[%s218 + $0x320] sm:$0xff]
        %v414 = vld [vmem:[%s218 + $0x328] sm:$0xff]
        %v415 = vld [vmem:[%s218 + $0x330] sm:$0xff]
        %v416 = vld [vmem:[%s218 + $0x338] sm:$0xff]
        %v417 = vld [vmem:[%s218 + $0x340] sm:$0xff]
        %v418 = vld [vmem:[%s218 + $0x348] sm:$0xff]
        %v419 = vld [vmem:[%s218 + $0x350] sm:$0xff]
        %v420 = vld [vmem:[%s218 + $0x358] sm:$0xff]
        %v421 = vld [vmem:[%s218 + $0x360] sm:$0xff]
        %v422 = vld [vmem:[%s218 + $0x368] sm:$0xff]
        %v423 = vld [vmem:[%s218 + $0x370] sm:$0xff]
        %v424 = vld [vmem:[%s218 + $0x378] sm:$0xff]
        %v425 = vld [vmem:[%s218 + $0x380] sm:$0xff]
        %v426 = vld [vmem:[%s218 + $0x388] sm:$0xff]
        %v427 = vld [vmem:[%s218 + $0x390] sm:$0xff]
        %v428 = vld [vmem:[%s218 + $0x398] sm:$0xff]
        %v429 = vld [vmem:[%s218 + $0x3a0] sm:$0xff]
        %v430 = vld [vmem:[%s218 + $0x3a8] sm:$0xff]
        %v431 = vld [vmem:[%s218 + $0x3b0] sm:$0xff]
        %v432 = vld [vmem:[%s218 + $0x3b8] sm:$0xff]
        %v433 = vld [vmem:[%s218 + $0x3c0] sm:$0xff]
        %v434 = vld [vmem:[%s218 + $0x3c8] sm:$0xff]
        %v435 = vld [vmem:[%s218 + $0x3d0] sm:$0xff]
        %v436 = vld [vmem:[%s218 + $0x3d8] sm:$0xff]
        %v437 = vld [vmem:[%s218 + $0x3e0] sm:$0xff]
        %v438 = vld [vmem:[%s218 + $0x3e8] sm:$0xff]
        %v439 = vld [vmem:[%s218 + $0x3f0] sm:$0xff]
        %v440 = vld [vmem:[%s218 + $0x3f8] sm:$0xff]
        %v441 = vld [vmem:[%s218 + $0x400] sm:$0xff]
        %v442 = vld [vmem:[%s218 + $0x408] sm:$0xff]
        %v443 = vld [vmem:[%s218 + $0x410] sm:$0xff]
        %v444 = vld [vmem:[%s218 + $0x418] sm:$0xff]
        %v445 = vld [vmem:[%s218 + $0x420] sm:$0xff]
        %v446 = vld [vmem:[%s218 + $0x428] sm:$0xff]
        %v447 = vld [vmem:[%s218 + $0x430] sm:$0xff]
        %v448 = vld [vmem:[%s218 + $0x438] sm:$0xff]
        %v449 = vld [vmem:[%s218 + $0x440] sm:$0xff]
        %v450 = vld [vmem:[%s218 + $0x448] sm:$0xff]
        %v451 = vld [vmem:[%s218 + $0x450] sm:$0xff]
        %v452 = vld [vmem:[%s218 + $0x458] sm:$0xff]
        %v453 = vld [vmem:[%s218 + $0x460] sm:$0xff]
        %v454 = vld [vmem:[%s218 + $0x468] sm:$0xff]
        %v455 = vld [vmem:[%s218 + $0x470] sm:$0xff]
        %v456 = vld [vmem:[%s218 + $0x478] sm:$0xff]
        %v457 = vld [vmem:[%s218 + $0x480] sm:$0xff]
        %v458 = vld [vmem:[%s218 + $0x488] sm:$0xff]
        %v459 = vld [vmem:[%s218 + $0x490] sm:$0xff]
        %v460 = vld [vmem:[%s218 + $0x498] sm:$0xff]
        %v461 = vld [vmem:[%s218 + $0x4a0] sm:$0xff]
        %v462 = vld [vmem:[%s218 + $0x4a8] sm:$0xff]
        %v463 = vld [vmem:[%s218 + $0x4b0] sm:$0xff]
        %v464 = vld [vmem:[%s218 + $0x4b8] sm:$0xff]
        %v465 = vld [vmem:[%s218 + $0x4c0] sm:$0xff]
        %v466 = vld [vmem:[%s218 + $0x4c8] sm:$0xff]
        %v467 = vld [vmem:[%s218 + $0x4d0] sm:$0xff]
        %v468 = vld [vmem:[%s218 + $0x4d8] sm:$0xff]
        %v469 = vld [vmem:[%s218 + $0x4e0] sm:$0xff]
        %v470 = vld [vmem:[%s218 + $0x4e8] sm:$0xff]
        %v471 = vld [vmem:[%s218 + $0x4f0] sm:$0xff]
        %v472 = vld [vmem:[%s218 + $0x4f8] sm:$0xff]
        %v473 = vld [vmem:[%s218 + $0x500] sm:$0xff]
        %v474 = vld [vmem:[%s218 + $0x508] sm:$0xff]
        %v475 = vld [vmem:[%s218 + $0x510] sm:$0xff]
        %v476 = vld [vmem:[%s218 + $0x518] sm:$0xff]
        %v477 = vld [vmem:[%s218 + $0x520] sm:$0xff]
        %v478 = vld [vmem:[%s218 + $0x528] sm:$0xff]
        %v479 = vld [vmem:[%s218 + $0x530] sm:$0xff]
        %v480 = vld [vmem:[%s218 + $0x538] sm:$0xff]
        %v481 = vld [vmem:[%s218 + $0x540] sm:$0xff]
        %v482 = vld [vmem:[%s218 + $0x548] sm:$0xff]
        %v483 = vld [vmem:[%s218 + $0x550] sm:$0xff]
        %v484 = vld [vmem:[%s218 + $0x558] sm:$0xff]
        %v485 = vld [vmem:[%s218 + $0x560] sm:$0xff]
        %v486 = vld [vmem:[%s218 + $0x568] sm:$0xff]
        %v487 = vld [vmem:[%s218 + $0x570] sm:$0xff]
        %v488 = vld [vmem:[%s218 + $0x578] sm:$0xff]
        %v489 = vld [vmem:[%s218 + $0x580] sm:$0xff]
        %v490 = vld [vmem:[%s218 + $0x588] sm:$0xff]
        %v491 = vld [vmem:[%s218 + $0x590] sm:$0xff]
        %v492 = vld [vmem:[%s218 + $0x598] sm:$0xff]
        %v493 = vld [vmem:[%s218 + $0x5a0] sm:$0xff]
        %v494 = vld [vmem:[%s218 + $0x5a8] sm:$0xff]
        %v495 = vld [vmem:[%s218 + $0x5b0] sm:$0xff]
        %v496 = vld [vmem:[%s218 + $0x5b8] sm:$0xff]
        %v497 = vld [vmem:[%s218 + $0x5c0] sm:$0xff]
        %v498 = vld [vmem:[%s218 + $0x5c8] sm:$0xff]
        %v499 = vld [vmem:[%s218 + $0x5d0] sm:$0xff]
        %v500 = vld [vmem:[%s218 + $0x5d8] sm:$0xff]
        %v501 = vld [vmem:[%s218 + $0x5e0] sm:$0xff]
        %v502 = vld [vmem:[%s218 + $0x5e8] sm:$0xff]
        %v503 = vld [vmem:[%s218 + $0x5f0] sm:$0xff]
        %v504 = vld [vmem:[%s218 + $0x5f8] sm:$0xff]
        %v505 = vld [vmem:[%s218 + $0x600] sm:$0xff]
        %v506 = vld [vmem:[%s218 + $0x608] sm:$0xff]
        %v507 = vld [vmem:[%s218 + $0x610] sm:$0xff]
        %v508 = vld [vmem:[%s218 + $0x618] sm:$0xff]
        %v509 = vld [vmem:[%s218 + $0x620] sm:$0xff]
        %v510 = vld [vmem:[%s218 + $0x628] sm:$0xff]
        %v511 = vld [vmem:[%s218 + $0x630] sm:$0xff]
        %v512 = vld [vmem:[%s218 + $0x638] sm:$0xff]
        %v513 = vld [vmem:[%s218 + $0x640] sm:$0xff]
        %v514 = vld [vmem:[%s218 + $0x648] sm:$0xff]
        %v515 = vld [vmem:[%s218 + $0x650] sm:$0xff]
        %v516 = vld [vmem:[%s218 + $0x658] sm:$0xff]
        %v517 = vld [vmem:[%s218 + $0x660] sm:$0xff]
        %v518 = vld [vmem:[%s218 + $0x668] sm:$0xff]
        %v519 = vld [vmem:[%s218 + $0x670] sm:$0xff]
        %v520 = vld [vmem:[%s218 + $0x678] sm:$0xff]
        %v521 = vld [vmem:[%s218 + $0x680] sm:$0xff]
        %v522 = vld [vmem:[%s218 + $0x688] sm:$0xff]
        %v523 = vld [vmem:[%s218 + $0x690] sm:$0xff]
        %v524 = vld [vmem:[%s218 + $0x698] sm:$0xff]
        %v525 = vld [vmem:[%s218 + $0x6a0] sm:$0xff]
        %v526 = vld [vmem:[%s218 + $0x6a8] sm:$0xff]
        %v527 = vld [vmem:[%s218 + $0x6b0] sm:$0xff]
        %v528 = vld [vmem:[%s218 + $0x6b8] sm:$0xff]
        %v529 = vld [vmem:[%s218 + $0x6c0] sm:$0xff]
        %v530 = vld [vmem:[%s218 + $0x6c8] sm:$0xff]
        %v531 = vld [vmem:[%s218 + $0x6d0] sm:$0xff]
        %v532 = vld [vmem:[%s218 + $0x6d8] sm:$0xff]
        %v533 = vld [vmem:[%s218 + $0x6e0] sm:$0xff]
        %v534 = vld [vmem:[%s218 + $0x6e8] sm:$0xff]
        %v535 = vld [vmem:[%s218 + $0x6f0] sm:$0xff]
        %v536 = vld [vmem:[%s218 + $0x6f8] sm:$0xff]
        %v537 = vld [vmem:[%s218 + $0x700] sm:$0xff]
        %v538 = vld [vmem:[%s218 + $0x708] sm:$0xff]
        %v539 = vld [vmem:[%s218 + $0x710] sm:$0xff]
        %v540 = vld [vmem:[%s218 + $0x718] sm:$0xff]
        %v541 = vld [vmem:[%s218 + $0x720] sm:$0xff]
        %v542 = vld [vmem:[%s218 + $0x728] sm:$0xff]
        %v543 = vld [vmem:[%s218 + $0x730] sm:$0xff]
        %v544 = vld [vmem:[%s218 + $0x738] sm:$0xff]
        %v545 = vld [vmem:[%s218 + $0x740] sm:$0xff]
        %v546 = vld [vmem:[%s218 + $0x748] sm:$0xff]
        %v547 = vld [vmem:[%s218 + $0x750] sm:$0xff]
        %v548 = vld [vmem:[%s218 + $0x758] sm:$0xff]
        %v549 = vld [vmem:[%s218 + $0x760] sm:$0xff]
        %v550 = vld [vmem:[%s218 + $0x768] sm:$0xff]
        %v551 = vld [vmem:[%s218 + $0x770] sm:$0xff]
        %v552 = vld [vmem:[%s218 + $0x778] sm:$0xff]
        %v553 = vld [vmem:[%s218 + $0x780] sm:$0xff]
        %v554 = vld [vmem:[%s218 + $0x788] sm:$0xff]
        %v555 = vld [vmem:[%s218 + $0x790] sm:$0xff]
        %v556 = vld [vmem:[%s218 + $0x798] sm:$0xff]
        %v557 = vld [vmem:[%s218 + $0x7a0] sm:$0xff]
        %v558 = vld [vmem:[%s218 + $0x7a8] sm:$0xff]
        %v559 = vld [vmem:[%s218 + $0x7b0] sm:$0xff]
        %v560 = vld [vmem:[%s218 + $0x7b8] sm:$0xff]
        %v561 = vld [vmem:[%s218 + $0x7c0] sm:$0xff]
        %v562 = vld [vmem:[%s218 + $0x7c8] sm:$0xff]
        %v563 = vld [vmem:[%s218 + $0x7d0] sm:$0xff]
        %v564 = vld [vmem:[%s218 + $0x7d8] sm:$0xff]
        %v565 = vld [vmem:[%s218 + $0x7e0] sm:$0xff]
        %v566 = vld [vmem:[%s218 + $0x7e8] sm:$0xff]
        %v567 = vld [vmem:[%s218 + $0x7f0] sm:$0xff]
        %v568 = vld [vmem:[%s218 + $0x7f8] sm:$0xff]
        %v569 = vld [vmem:[%s218 + $0x800] sm:$0xff]
        %v570 = vld [vmem:[%s218 + $0x808] sm:$0xff]
        %v571 = vld [vmem:[%s218 + $0x810] sm:$0xff]
        %v572 = vld [vmem:[%s218 + $0x818] sm:$0xff]
        %v573 = vld [vmem:[%s218 + $0x820] sm:$0xff]
        %v574 = vld [vmem:[%s218 + $0x828] sm:$0xff]
        %v575 = vld [vmem:[%s218 + $0x830] sm:$0xff]
        %v576 = vld [vmem:[%s218 + $0x838] sm:$0xff]
        %v577 = vld [vmem:[%s218 + $0x840] sm:$0xff]
        %v578 = vld [vmem:[%s218 + $0x848] sm:$0xff]
        %v579 = vld [vmem:[%s218 + $0x850] sm:$0xff]
        %v580 = vld [vmem:[%s218 + $0x858] sm:$0xff]
        %v581 = vld [vmem:[%s218 + $0x860] sm:$0xff]
        %v582 = vld [vmem:[%s218 + $0x868] sm:$0xff]
        %v583 = vld [vmem:[%s218 + $0x870] sm:$0xff]
        %v584 = vld [vmem:[%s218 + $0x878] sm:$0xff]
        %v585 = vld [vmem:[%s218 + $0x880] sm:$0xff]
        %v586 = vld [vmem:[%s218 + $0x888] sm:$0xff]
        %v587 = vld [vmem:[%s218 + $0x890] sm:$0xff]
        %v588 = vld [vmem:[%s218 + $0x898] sm:$0xff]
        %v589 = vld [vmem:[%s218 + $0x8a0] sm:$0xff]
        %v590 = vld [vmem:[%s218 + $0x8a8] sm:$0xff]
        %v591 = vld [vmem:[%s218 + $0x8b0] sm:$0xff]
        %v592 = vld [vmem:[%s218 + $0x8b8] sm:$0xff]
        %v593 = vld [vmem:[%s218 + $0x8c0] sm:$0xff]
        %v594 = vld [vmem:[%s218 + $0x8c8] sm:$0xff]
        %v595 = vld [vmem:[%s218 + $0x8d0] sm:$0xff]
        %v596 = vld [vmem:[%s218 + $0x8d8] sm:$0xff]
        %v597 = vld [vmem:[%s218 + $0x8e0] sm:$0xff]
        %v598 = vld [vmem:[%s218 + $0x8e8] sm:$0xff]
        %v599 = vld [vmem:[%s218 + $0x8f0] sm:$0xff]
        %v600 = vld [vmem:[%s218 + $0x8f8] sm:$0xff]
        %v601 = vld [vmem:[%s218 + $0x900] sm:$0xff]
        %v602 = vld [vmem:[%s218 + $0x908] sm:$0xff]
        %v603 = vld [vmem:[%s218 + $0x910] sm:$0xff]
        %v604 = vld [vmem:[%s218 + $0x918] sm:$0xff]
        %v605 = vld [vmem:[%s218 + $0x920] sm:$0xff]
        %v606 = vld [vmem:[%s218 + $0x928] sm:$0xff]
        %v607 = vld [vmem:[%s218 + $0x930] sm:$0xff]
        %v608 = vld [vmem:[%s218 + $0x938] sm:$0xff]
        %v609 = vld [vmem:[%s218 + $0x940] sm:$0xff]
        %v610 = vld [vmem:[%s218 + $0x948] sm:$0xff]
        %v611 = vld [vmem:[%s218 + $0x950] sm:$0xff]
        %v612 = vld [vmem:[%s218 + $0x958] sm:$0xff]
        %v613 = vld [vmem:[%s218 + $0x960] sm:$0xff]
        %v614 = vld [vmem:[%s218 + $0x968] sm:$0xff]
        %v615 = vld [vmem:[%s218 + $0x970] sm:$0xff]
        %v616 = vld [vmem:[%s218 + $0x978] sm:$0xff]
        %v617 = vld [vmem:[%s218 + $0x980] sm:$0xff]
        %v618 = vld [vmem:[%s218 + $0x988] sm:$0xff]
        %v619 = vld [vmem:[%s218 + $0x990] sm:$0xff]
        %v620 = vld [vmem:[%s218 + $0x998] sm:$0xff]
        %v621 = vld [vmem:[%s218 + $0x9a0] sm:$0xff]
        %v622 = vld [vmem:[%s218 + $0x9a8] sm:$0xff]
        %v623 = vld [vmem:[%s218 + $0x9b0] sm:$0xff]
        %v624 = vld [vmem:[%s218 + $0x9b8] sm:$0xff]
        %v625 = vld [vmem:[%s218 + $0x9c0] sm:$0xff]
        %v626 = vld [vmem:[%s218 + $0x9c8] sm:$0xff]
        %v627 = vld [vmem:[%s218 + $0x9d0] sm:$0xff]
        %v628 = vld [vmem:[%s218 + $0x9d8] sm:$0xff]
        %v629 = vld [vmem:[%s218 + $0x9e0] sm:$0xff]
        %v630 = vld [vmem:[%s218 + $0x9e8] sm:$0xff]
        %v631 = vld [vmem:[%s218 + $0x9f0] sm:$0xff]
        %v632 = vld [vmem:[%s218 + $0x9f8] sm:$0xff]
        %v633 = vld [vmem:[%s218 + $0xa00] sm:$0xff]
        %v634 = vld [vmem:[%s218 + $0xa08] sm:$0xff]
        %v635 = vld [vmem:[%s218 + $0xa10] sm:$0xff]
        %v636 = vld [vmem:[%s218 + $0xa18] sm:$0xff]
        %v637 = vld [vmem:[%s218 + $0xa20] sm:$0xff]
        %v638 = vld [vmem:[%s218 + $0xa28] sm:$0xff]
        %v639 = vld [vmem:[%s218 + $0xa30] sm:$0xff]
        %v640 = vld [vmem:[%s218 + $0xa38] sm:$0xff]
        %v641 = vld [vmem:[%s218 + $0xa40] sm:$0xff]
        %v642 = vld [vmem:[%s218 + $0xa48] sm:$0xff]
        %v643 = vld [vmem:[%s218 + $0xa50] sm:$0xff]
        %v644 = vld [vmem:[%s218 + $0xa58] sm:$0xff]
        %v645 = vld [vmem:[%s218 + $0xa60] sm:$0xff]
        %v646 = vld [vmem:[%s218 + $0xa68] sm:$0xff]
        %v647 = vld [vmem:[%s218 + $0xa70] sm:$0xff]
        %v648 = vld [vmem:[%s218 + $0xa78] sm:$0xff]
        %v649 = vld [vmem:[%s218 + $0xa80] sm:$0xff]
        %v650 = vld [vmem:[%s218 + $0xa88] sm:$0xff]
        %v651 = vld [vmem:[%s218 + $0xa90] sm:$0xff]
        %v652 = vld [vmem:[%s218 + $0xa98] sm:$0xff]
        %v653 = vld [vmem:[%s218 + $0xaa0] sm:$0xff]
        %v654 = vld [vmem:[%s218 + $0xaa8] sm:$0xff]
        %v655 = vld [vmem:[%s218 + $0xab0] sm:$0xff]
        %v656 = vld [vmem:[%s218 + $0xab8] sm:$0xff]
        %v657 = vld [vmem:[%s218 + $0xac0] sm:$0xff]
        %v658 = vld [vmem:[%s218 + $0xac8] sm:$0xff]
        %v659 = vld [vmem:[%s218 + $0xad0] sm:$0xff]
        %v660 = vld [vmem:[%s218 + $0xad8] sm:$0xff]
        %v661 = vld [vmem:[%s218 + $0xae0] sm:$0xff]
        %v662 = vld [vmem:[%s218 + $0xae8] sm:$0xff]
        %v663 = vld [vmem:[%s218 + $0xaf0] sm:$0xff]
        %v664 = vld [vmem:[%s218 + $0xaf8] sm:$0xff]
        %v665 = vld [vmem:[%s218 + $0xb00] sm:$0xff]
        %v666 = vld [vmem:[%s218 + $0xb08] sm:$0xff]
        %v667 = vld [vmem:[%s218 + $0xb10] sm:$0xff]
        %v668 = vld [vmem:[%s218 + $0xb18] sm:$0xff]
        %v669 = vld [vmem:[%s218 + $0xb20] sm:$0xff]
        %v670 = vld [vmem:[%s218 + $0xb28] sm:$0xff]
        %v671 = vld [vmem:[%s218 + $0xb30] sm:$0xff]
        %v672 = vld [vmem:[%s218 + $0xb38] sm:$0xff]
        %v673 = vld [vmem:[%s218 + $0xb40] sm:$0xff]
        %v674 = vld [vmem:[%s218 + $0xb48] sm:$0xff]
        %v675 = vld [vmem:[%s218 + $0xb50] sm:$0xff]
        %v676 = vld [vmem:[%s218 + $0xb58] sm:$0xff]
        %v677 = vld [vmem:[%s218 + $0xb60] sm:$0xff]
        %v678 = vld [vmem:[%s218 + $0xb68] sm:$0xff]
        %v679 = vld [vmem:[%s218 + $0xb70] sm:$0xff]
        %v680 = vld [vmem:[%s218 + $0xb78] sm:$0xff]
        %v681 = vld [vmem:[%s218 + $0xb80] sm:$0xff]
        %v682 = vld [vmem:[%s218 + $0xb88] sm:$0xff]
        %v683 = vld [vmem:[%s218 + $0xb90] sm:$0xff]
        %v684 = vld [vmem:[%s218 + $0xb98] sm:$0xff]
        %v685 = vld [vmem:[%s218 + $0xba0] sm:$0xff]
        %v686 = vld [vmem:[%s218 + $0xba8] sm:$0xff]
        %v687 = vld [vmem:[%s218 + $0xbb0] sm:$0xff]
        %v688 = vld [vmem:[%s218 + $0xbb8] sm:$0xff]
        %v689 = vld [vmem:[%s218 + $0xbc0] sm:$0xff]
        %v690 = vld [vmem:[%s218 + $0xbc8] sm:$0xff]
        %v691 = vld [vmem:[%s218 + $0xbd0] sm:$0xff]
        %v692 = vld [vmem:[%s218 + $0xbd8] sm:$0xff]
        %v693 = vld [vmem:[%s218 + $0xbe0] sm:$0xff]
        %v694 = vld [vmem:[%s218 + $0xbe8] sm:$0xff]
        %v695 = vld [vmem:[%s218 + $0xbf0] sm:$0xff]
        %v696 = vld [vmem:[%s218 + $0xbf8] sm:$0xff]
        %v697 = vld [vmem:[%s218 + $0xc00] sm:$0xff]
        %v698 = vld [vmem:[%s218 + $0xc08] sm:$0xff]
        %v699 = vld [vmem:[%s218 + $0xc10] sm:$0xff]
        %v700 = vld [vmem:[%s218 + $0xc18] sm:$0xff]
        %v701 = vld [vmem:[%s218 + $0xc20] sm:$0xff]
        %v702 = vld [vmem:[%s218 + $0xc28] sm:$0xff]
        %v703 = vld [vmem:[%s218 + $0xc30] sm:$0xff]
        %v704 = vld [vmem:[%s218 + $0xc38] sm:$0xff]
        %v705 = vld [vmem:[%s218 + $0xc40] sm:$0xff]
        %v706 = vld [vmem:[%s218 + $0xc48] sm:$0xff]
        %v707 = vld [vmem:[%s218 + $0xc50] sm:$0xff]
        %v708 = vld [vmem:[%s218 + $0xc58] sm:$0xff]
        %v709 = vld [vmem:[%s218 + $0xc60] sm:$0xff]
        %v710 = vld [vmem:[%s218 + $0xc68] sm:$0xff]
        %v711 = vld [vmem:[%s218 + $0xc70] sm:$0xff]
        %v712 = vld [vmem:[%s218 + $0xc78] sm:$0xff]
        %v713 = vld [vmem:[%s218 + $0xc80] sm:$0xff]
        %v714 = vld [vmem:[%s218 + $0xc88] sm:$0xff]
        %v715 = vld [vmem:[%s218 + $0xc90] sm:$0xff]
        %v716 = vld [vmem:[%s218 + $0xc98] sm:$0xff]
        %v717 = vld [vmem:[%s218 + $0xca0] sm:$0xff]
        %v718 = vld [vmem:[%s218 + $0xca8] sm:$0xff]
        %v719 = vld [vmem:[%s218 + $0xcb0] sm:$0xff]
        %v720 = vld [vmem:[%s218 + $0xcb8] sm:$0xff]
        %v721 = vld [vmem:[%s218 + $0xcc0] sm:$0xff]
        %v722 = vld [vmem:[%s218 + $0xcc8] sm:$0xff]
        %v723 = vld [vmem:[%s218 + $0xcd0] sm:$0xff]
        %v724 = vld [vmem:[%s218 + $0xcd8] sm:$0xff]
        %v725 = vld [vmem:[%s218 + $0xce0] sm:$0xff]
        %v726 = vld [vmem:[%s218 + $0xce8] sm:$0xff]
        %v727 = vld [vmem:[%s218 + $0xcf0] sm:$0xff]
        %v728 = vld [vmem:[%s218 + $0xcf8] sm:$0xff]
        %v729 = vld [vmem:[%s218 + $0xd00] sm:$0xff]
        %v730 = vld [vmem:[%s218 + $0xd08] sm:$0xff]
        %v731 = vld [vmem:[%s218 + $0xd10] sm:$0xff]
        %v732 = vld [vmem:[%s218 + $0xd18] sm:$0xff]
        %v733 = vld [vmem:[%s218 + $0xd20] sm:$0xff]
        %v734 = vld [vmem:[%s218 + $0xd28] sm:$0xff]
        %v735 = vld [vmem:[%s218 + $0xd30] sm:$0xff]
        %v736 = vld [vmem:[%s218 + $0xd38] sm:$0xff]
        %v737 = vld [vmem:[%s218 + $0xd40] sm:$0xff]
        %v738 = vld [vmem:[%s218 + $0xd48] sm:$0xff]
        %v739 = vld [vmem:[%s218 + $0xd50] sm:$0xff]
        %v740 = vld [vmem:[%s218 + $0xd58] sm:$0xff]
        %v741 = vld [vmem:[%s218 + $0xd60] sm:$0xff]
        %v742 = vld [vmem:[%s218 + $0xd68] sm:$0xff]
        %v743 = vld [vmem:[%s218 + $0xd70] sm:$0xff]
        %v744 = vld [vmem:[%s218 + $0xd78] sm:$0xff]
        %v745 = vld [vmem:[%s218 + $0xd80] sm:$0xff]
        %v746 = vld [vmem:[%s218 + $0xd88] sm:$0xff]
        %v747 = vld [vmem:[%s218 + $0xd90] sm:$0xff]
        %v748 = vld [vmem:[%s218 + $0xd98] sm:$0xff]
        %v749 = vld [vmem:[%s218 + $0xda0] sm:$0xff]
        %v750 = vld [vmem:[%s218 + $0xda8] sm:$0xff]
        %v751 = vld [vmem:[%s218 + $0xdb0] sm:$0xff]
        %v752 = vld [vmem:[%s218 + $0xdb8] sm:$0xff]
        %v753 = vld [vmem:[%s218 + $0xdc0] sm:$0xff]
        %v754 = vld [vmem:[%s218 + $0xdc8] sm:$0xff]
        %v755 = vld [vmem:[%s218 + $0xdd0] sm:$0xff]
        %v756 = vld [vmem:[%s218 + $0xdd8] sm:$0xff]
        %v757 = vld [vmem:[%s218 + $0xde0] sm:$0xff]
        %v758 = vld [vmem:[%s218 + $0xde8] sm:$0xff]
        %v759 = vld [vmem:[%s218 + $0xdf0] sm:$0xff]
        %v760 = vld [vmem:[%s218 + $0xdf8] sm:$0xff]
        %v761 = vld [vmem:[%s218 + $0xe00] sm:$0xff]
        %v762 = vld [vmem:[%s218 + $0xe08] sm:$0xff]
        %v763 = vld [vmem:[%s218 + $0xe10] sm:$0xff]
        %v764 = vld [vmem:[%s218 + $0xe18] sm:$0xff]
        %v765 = vld [vmem:[%s218 + $0xe20] sm:$0xff]
        %v766 = vld [vmem:[%s218 + $0xe28] sm:$0xff]
        %v767 = vld [vmem:[%s218 + $0xe30] sm:$0xff]
        %v768 = vld [vmem:[%s218 + $0xe38] sm:$0xff]
        %v769 = vld [vmem:[%s218 + $0xe40] sm:$0xff]
        %v770 = vld [vmem:[%s218 + $0xe48] sm:$0xff]
        %v771 = vld [vmem:[%s218 + $0xe50] sm:$0xff]
        %v772 = vld [vmem:[%s218 + $0xe58] sm:$0xff]
        %v773 = vld [vmem:[%s218 + $0xe60] sm:$0xff]
        %v774 = vld [vmem:[%s218 + $0xe68] sm:$0xff]
        %v775 = vld [vmem:[%s218 + $0xe70] sm:$0xff]
        %v776 = vld [vmem:[%s218 + $0xe78] sm:$0xff]
        %v777 = vld [vmem:[%s218 + $0xe80] sm:$0xff]
        %v778 = vld [vmem:[%s218 + $0xe88] sm:$0xff]
        %v779 = vld [vmem:[%s218 + $0xe90] sm:$0xff]
        %v780 = vld [vmem:[%s218 + $0xe98] sm:$0xff]
        %v781 = vld [vmem:[%s218 + $0xea0] sm:$0xff]
        %v782 = vld [vmem:[%s218 + $0xea8] sm:$0xff]
        %v783 = vld [vmem:[%s218 + $0xeb0] sm:$0xff]
        %v784 = vld [vmem:[%s218 + $0xeb8] sm:$0xff]
        %v785 = vld [vmem:[%s218 + $0xec0] sm:$0xff]
        %v786 = vld [vmem:[%s218 + $0xec8] sm:$0xff]
        %v787 = vld [vmem:[%s218 + $0xed0] sm:$0xff]
        %v788 = vld [vmem:[%s218 + $0xed8] sm:$0xff]
        %v789 = vld [vmem:[%s218 + $0xee0] sm:$0xff]
        %v790 = vld [vmem:[%s218 + $0xee8] sm:$0xff]
        %v791 = vld [vmem:[%s218 + $0xef0] sm:$0xff]
        %v792 = vld [vmem:[%s218 + $0xef8] sm:$0xff]
        %v793 = vld [vmem:[%s218 + $0xf00] sm:$0xff]
        %v794 = vld [vmem:[%s218 + $0xf08] sm:$0xff]
        %v795 = vld [vmem:[%s218 + $0xf10] sm:$0xff]
        %v796 = vld [vmem:[%s218 + $0xf18] sm:$0xff]
        %v797 = vld [vmem:[%s218 + $0xf20] sm:$0xff]
        %v798 = vld [vmem:[%s218 + $0xf28] sm:$0xff]
        %v799 = vld [vmem:[%s218 + $0xf30] sm:$0xff]
        %v800 = vld [vmem:[%s218 + $0xf38] sm:$0xff]
        %v801 = vld [vmem:[%s218 + $0xf40] sm:$0xff]
        %v802 = vld [vmem:[%s218 + $0xf48] sm:$0xff]
        %v803 = vld [vmem:[%s218 + $0xf50] sm:$0xff]
        %v804 = vld [vmem:[%s218 + $0xf58] sm:$0xff]
        %v805 = vld [vmem:[%s218 + $0xf60] sm:$0xff]
        %v806 = vld [vmem:[%s218 + $0xf68] sm:$0xff]
        %v807 = vld [vmem:[%s218 + $0xf70] sm:$0xff]
        %v808 = vld [vmem:[%s218 + $0xf78] sm:$0xff]
        %v809 = vld [vmem:[%s218 + $0xf80] sm:$0xff]
        %v810 = vld [vmem:[%s218 + $0xf88] sm:$0xff]
        %v811 = vld [vmem:[%s218 + $0xf90] sm:$0xff]
        %v812 = vld [vmem:[%s218 + $0xf98] sm:$0xff]
        %v813 = vld [vmem:[%s218 + $0xfa0] sm:$0xff]
        %v814 = vld [vmem:[%s218 + $0xfa8] sm:$0xff]
        %v815 = vld [vmem:[%s218 + $0xfb0] sm:$0xff]
        %v816 = vld [vmem:[%s218 + $0xfb8] sm:$0xff]
        %v817 = vld [vmem:[%s218 + $0xfc0] sm:$0xff]
        %v818 = vld [vmem:[%s218 + $0xfc8] sm:$0xff]
        %v819 = vld [vmem:[%s218 + $0xfd0] sm:$0xff]
        %v820 = vld [vmem:[%s218 + $0xfd8] sm:$0xff]
        %v821 = vld [vmem:[%s218 + $0xfe0] sm:$0xff]
        %v822 = vld [vmem:[%s218 + $0xfe8] sm:$0xff]
        %v823 = vld [vmem:[%s218 + $0xff0] sm:$0xff]
        %v824 = vld [vmem:[%s218 + $0xff8] sm:$0xff]
        %v825 = vld [vmem:[%s218 + $0x1000] sm:$0xff]
        %v826 = vld [vmem:[%s218 + $0x1008] sm:$0xff]
        %v827 = vld [vmem:[%s218 + $0x1010] sm:$0xff]
        %v828 = vld [vmem:[%s218 + $0x1018] sm:$0xff]
        %v829 = vld [vmem:[%s218 + $0x1020] sm:$0xff]
        %v830 = vld [vmem:[%s218 + $0x1028] sm:$0xff]
        %v831 = vld [vmem:[%s218 + $0x1030] sm:$0xff]
        %v832 = vld [vmem:[%s218 + $0x1038] sm:$0xff]
        %v833 = vld [vmem:[%s218 + $0x1040] sm:$0xff]
        %v834 = vld [vmem:[%s218 + $0x1048] sm:$0xff]
        %v835 = vld [vmem:[%s218 + $0x1050] sm:$0xff]
        %v836 = vld [vmem:[%s218 + $0x1058] sm:$0xff]
        %v837 = vld [vmem:[%s218 + $0x1060] sm:$0xff]
        %v838 = vld [vmem:[%s218 + $0x1068] sm:$0xff]
        %v839 = vld [vmem:[%s218 + $0x1070] sm:$0xff]
        %v840 = vld [vmem:[%s218 + $0x1078] sm:$0xff]
        %v841 = vld [vmem:[%s218 + $0x1080] sm:$0xff]
        %v842 = vld [vmem:[%s218 + $0x1088] sm:$0xff]
        %v843 = vld [vmem:[%s218 + $0x1090] sm:$0xff]
        %v844 = vld [vmem:[%s218 + $0x1098] sm:$0xff]
        %v845 = vld [vmem:[%s218 + $0x10a0] sm:$0xff]
        %v846 = vld [vmem:[%s218 + $0x10a8] sm:$0xff]
        %v847 = vld [vmem:[%s218 + $0x10b0] sm:$0xff]
        %v848 = vld [vmem:[%s218 + $0x10b8] sm:$0xff]
        %v849 = vld [vmem:[%s218 + $0x10c0] sm:$0xff]
        %v850 = vld [vmem:[%s218 + $0x10c8] sm:$0xff]
        %v851 = vld [vmem:[%s218 + $0x10d0] sm:$0xff]
        %v852 = vld [vmem:[%s218 + $0x10d8] sm:$0xff]
        %v853 = vld [vmem:[%s218 + $0x10e0] sm:$0xff]
        %v854 = vld [vmem:[%s218 + $0x10e8] sm:$0xff]
        %v855 = vld [vmem:[%s218 + $0x10f0] sm:$0xff]
        %v856 = vld [vmem:[%s218 + $0x10f8] sm:$0xff]
        %v857 = vld [vmem:[%s218 + $0x1100] sm:$0xff]
        %v858 = vld [vmem:[%s218 + $0x1108] sm:$0xff]
        %v859 = vld [vmem:[%s218 + $0x1110] sm:$0xff]
        %v860 = vld [vmem:[%s218 + $0x1118] sm:$0xff]
        %v861 = vld [vmem:[%s218 + $0x1120] sm:$0xff]
        %v862 = vld [vmem:[%s218 + $0x1128] sm:$0xff]
        %v863 = vld [vmem:[%s218 + $0x1130] sm:$0xff]
        %v864 = vld [vmem:[%s218 + $0x1138] sm:$0xff]
        %v865 = vld [vmem:[%s218 + $0x1140] sm:$0xff]
        %v866 = vld [vmem:[%s218 + $0x1148] sm:$0xff]
        %v867 = vld [vmem:[%s218 + $0x1150] sm:$0xff]
        %v868 = vld [vmem:[%s218 + $0x1158] sm:$0xff]
        %v869 = vld [vmem:[%s218 + $0x1160] sm:$0xff]
        %v870 = vld [vmem:[%s218 + $0x1168] sm:$0xff]
        %v871 = vld [vmem:[%s218 + $0x1170] sm:$0xff]
        %v872 = vld [vmem:[%s218 + $0x1178] sm:$0xff]
        %v873 = vld [vmem:[%s218 + $0x1180] sm:$0xff]
        %v874 = vld [vmem:[%s218 + $0x1188] sm:$0xff]
        %v875 = vld [vmem:[%s218 + $0x1190] sm:$0xff]
        %v876 = vld [vmem:[%s218 + $0x1198] sm:$0xff]
        %v877 = vld [vmem:[%s218 + $0x11a0] sm:$0xff]
        %v878 = vld [vmem:[%s218 + $0x11a8] sm:$0xff]
        %v879 = vld [vmem:[%s218 + $0x11b0] sm:$0xff]
        %v880 = vld [vmem:[%s218 + $0x11b8] sm:$0xff]
        %v881 = vld [vmem:[%s218 + $0x11c0] sm:$0xff]
        %v882 = vld [vmem:[%s218 + $0x11c8] sm:$0xff]
        %v883 = vld [vmem:[%s218 + $0x11d0] sm:$0xff]
        %v884 = vld [vmem:[%s218 + $0x11d8] sm:$0xff]
        %v885 = vld [vmem:[%s218 + $0x11e0] sm:$0xff]
        %v886 = vld [vmem:[%s218 + $0x11e8] sm:$0xff]
        %v887 = vld [vmem:[%s218 + $0x11f0] sm:$0xff]
        %v888 = vld [vmem:[%s218 + $0x11f8] sm:$0xff]
        %v889 = vld [vmem:[%s218 + $0x1200] sm:$0xff]
        %v890 = vld [vmem:[%s218 + $0x1208] sm:$0xff]
        %v891 = vld [vmem:[%s218 + $0x1210] sm:$0xff]
        %v892 = vld [vmem:[%s218 + $0x1218] sm:$0xff]
        %v893 = vld [vmem:[%s218 + $0x1220] sm:$0xff]
        %v894 = vld [vmem:[%s218 + $0x1228] sm:$0xff]
        %v895 = vld [vmem:[%s218 + $0x1230] sm:$0xff]
        %v896 = vld [vmem:[%s218 + $0x1238] sm:$0xff]
        %v897 = vld [vmem:[%s218 + $0x1240] sm:$0xff]
        %v898 = vld [vmem:[%s218 + $0x1248] sm:$0xff]
        %v899 = vld [vmem:[%s218 + $0x1250] sm:$0xff]
        %v900 = vld [vmem:[%s218 + $0x1258] sm:$0xff]
        %v901 = vld [vmem:[%s218 + $0x1260] sm:$0xff]
        %v902 = vld [vmem:[%s218 + $0x1268] sm:$0xff]
        %v903 = vld [vmem:[%s218 + $0x1270] sm:$0xff]
        %v904 = vld [vmem:[%s218 + $0x1278] sm:$0xff]
        %v905 = vld [vmem:[%s218 + $0x1280] sm:$0xff]
        %v906 = vld [vmem:[%s218 + $0x1288] sm:$0xff]
        %v907 = vld [vmem:[%s218 + $0x1290] sm:$0xff]
        %v908 = vld [vmem:[%s218 + $0x1298] sm:$0xff]
        %v909 = vld [vmem:[%s218 + $0x12a0] sm:$0xff]
        %v910 = vld [vmem:[%s218 + $0x12a8] sm:$0xff]
        %v911 = vld [vmem:[%s218 + $0x12b0] sm:$0xff]
        %v912 = vld [vmem:[%s218 + $0x12b8] sm:$0xff]
        %v913 = vld [vmem:[%s218 + $0x12c0] sm:$0xff]
        %v914 = vld [vmem:[%s218 + $0x12c8] sm:$0xff]
        %v915 = vld [vmem:[%s218 + $0x12d0] sm:$0xff]
        %v916 = vld [vmem:[%s218 + $0x12d8] sm:$0xff]
        %v917 = vld [vmem:[%s218 + $0x12e0] sm:$0xff]
        %v918 = vld [vmem:[%s218 + $0x12e8] sm:$0xff]
        %v919 = vld [vmem:[%s218 + $0x12f0] sm:$0xff]
        %v920 = vld [vmem:[%s218 + $0x12f8] sm:$0xff]
        %v921 = vld [vmem:[%s218 + $0x1300] sm:$0xff]
        %v922 = vld [vmem:[%s218 + $0x1308] sm:$0xff]
        %v923 = vld [vmem:[%s218 + $0x1310] sm:$0xff]
        %v924 = vld [vmem:[%s218 + $0x1318] sm:$0xff]
        %v925 = vld [vmem:[%s218 + $0x1320] sm:$0xff]
        %v926 = vld [vmem:[%s218 + $0x1328] sm:$0xff]
        %v927 = vld [vmem:[%s218 + $0x1330] sm:$0xff]
        %v928 = vld [vmem:[%s218 + $0x1338] sm:$0xff]
        %v929 = vld [vmem:[%s218 + $0x1340] sm:$0xff]
        %v930 = vld [vmem:[%s218 + $0x1348] sm:$0xff]
        %v931 = vld [vmem:[%s218 + $0x1350] sm:$0xff]
        %v932 = vld [vmem:[%s218 + $0x1358] sm:$0xff]
        %v933 = vld [vmem:[%s218 + $0x1360] sm:$0xff]
        %v934 = vld [vmem:[%s218 + $0x1368] sm:$0xff]
        %v935 = vld [vmem:[%s218 + $0x1370] sm:$0xff]
        %v936 = vld [vmem:[%s218 + $0x1378] sm:$0xff]
        %v937 = vld [vmem:[%s218 + $0x1380] sm:$0xff]
        %v938 = vld [vmem:[%s218 + $0x1388] sm:$0xff]
        %v939 = vld [vmem:[%s218 + $0x1390] sm:$0xff]
        %v940 = vld [vmem:[%s218 + $0x1398] sm:$0xff]
        %v941 = vld [vmem:[%s218 + $0x13a0] sm:$0xff]
        %v942 = vld [vmem:[%s218 + $0x13a8] sm:$0xff]
        %v943 = vld [vmem:[%s218 + $0x13b0] sm:$0xff]
        %v944 = vld [vmem:[%s218 + $0x13b8] sm:$0xff]
        %v945 = vld [vmem:[%s218 + $0x13c0] sm:$0xff]
        %v946 = vld [vmem:[%s218 + $0x13c8] sm:$0xff]
        %v947 = vld [vmem:[%s218 + $0x13d0] sm:$0xff]
        %v948 = vld [vmem:[%s218 + $0x13d8] sm:$0xff]
        %v949 = vld [vmem:[%s218 + $0x13e0] sm:$0xff]
        %v950 = vld [vmem:[%s218 + $0x13e8] sm:$0xff]
        %v951 = vld [vmem:[%s218 + $0x13f0] sm:$0xff]
        %v952 = vld [vmem:[%s218 + $0x13f8] sm:$0xff]
        %v953 = vld [vmem:[%s218 + $0x1400] sm:$0xff]
        %v954 = vld [vmem:[%s218 + $0x1408] sm:$0xff]
        %v955 = vld [vmem:[%s218 + $0x1410] sm:$0xff]
        %v956 = vld [vmem:[%s218 + $0x1418] sm:$0xff]
        %v957 = vld [vmem:[%s218 + $0x1420] sm:$0xff]
        %v958 = vld [vmem:[%s218 + $0x1428] sm:$0xff]
        %v959 = vld [vmem:[%s218 + $0x1430] sm:$0xff]
        %v960 = vld [vmem:[%s218 + $0x1438] sm:$0xff]
        %v961 = vld [vmem:[%s218 + $0x1440] sm:$0xff]
        %v962 = vld [vmem:[%s218 + $0x1448] sm:$0xff]
        %v963 = vld [vmem:[%s218 + $0x1450] sm:$0xff]
        %v964 = vld [vmem:[%s218 + $0x1458] sm:$0xff]
        %v965 = vld [vmem:[%s218 + $0x1460] sm:$0xff]
        %v966 = vld [vmem:[%s218 + $0x1468] sm:$0xff]
        %v967 = vld [vmem:[%s218 + $0x1470] sm:$0xff]
        %v968 = vld [vmem:[%s218 + $0x1478] sm:$0xff]
        %v969 = vld [vmem:[%s218 + $0x1480] sm:$0xff]
        %v970 = vld [vmem:[%s218 + $0x1488] sm:$0xff]
        %v971 = vld [vmem:[%s218 + $0x1490] sm:$0xff]
        %v972 = vld [vmem:[%s218 + $0x1498] sm:$0xff]
        %v973 = vld [vmem:[%s218 + $0x14a0] sm:$0xff]
        %v974 = vld [vmem:[%s218 + $0x14a8] sm:$0xff]
        %v975 = vld [vmem:[%s218 + $0x14b0] sm:$0xff]
        %v976 = vld [vmem:[%s218 + $0x14b8] sm:$0xff]
        %v977 = vld [vmem:[%s218 + $0x14c0] sm:$0xff]
        %v978 = vld [vmem:[%s218 + $0x14c8] sm:$0xff]
        %v979 = vld [vmem:[%s218 + $0x14d0] sm:$0xff]
        %v980 = vld [vmem:[%s218 + $0x14d8] sm:$0xff]
        %v981 = vld [vmem:[%s218 + $0x14e0] sm:$0xff]
        %v982 = vld [vmem:[%s218 + $0x14e8] sm:$0xff]
        %v983 = vld [vmem:[%s218 + $0x14f0] sm:$0xff]
        %v984 = vld [vmem:[%s218 + $0x14f8] sm:$0xff]
        %v985 = vld [vmem:[%s218 + $0x1500] sm:$0xff]
        %v986 = vld [vmem:[%s218 + $0x1508] sm:$0xff]
        %v987 = vld [vmem:[%s218 + $0x1510] sm:$0xff]
        %v988 = vld [vmem:[%s218 + $0x1518] sm:$0xff]
        %v989 = vld [vmem:[%s218 + $0x1520] sm:$0xff]
        %v990 = vld [vmem:[%s218 + $0x1528] sm:$0xff]
        %v991 = vld [vmem:[%s218 + $0x1530] sm:$0xff]
        %v992 = vld [vmem:[%s218 + $0x1538] sm:$0xff]
        %v993 = vld [vmem:[%s218 + $0x1540] sm:$0xff]
        %v994 = vld [vmem:[%s218 + $0x1548] sm:$0xff]
        %v995 = vld [vmem:[%s218 + $0x1550] sm:$0xff]
        %v996 = vld [vmem:[%s218 + $0x1558] sm:$0xff]
        %v997 = vld [vmem:[%s218 + $0x1560] sm:$0xff]
        %v998 = vld [vmem:[%s218 + $0x1568] sm:$0xff]
        %v999 = vld [vmem:[%s218 + $0x1570] sm:$0xff]
        %v1000 = vld [vmem:[%s218 + $0x1578] sm:$0xff]
        %v1001 = vld [vmem:[%s218 + $0x1580] sm:$0xff]
        %v1002 = vld [vmem:[%s218 + $0x1588] sm:$0xff]
        %v1003 = vld [vmem:[%s218 + $0x1590] sm:$0xff]
        %v1004 = vld [vmem:[%s218 + $0x1598] sm:$0xff]
        %v1005 = vld [vmem:[%s218 + $0x15a0] sm:$0xff]
        %v1006 = vld [vmem:[%s218 + $0x15a8] sm:$0xff]
        %v1007 = vld [vmem:[%s218 + $0x15b0] sm:$0xff]
        %v1008 = vld [vmem:[%s218 + $0x15b8] sm:$0xff]
        %v1009 = vld [vmem:[%s218 + $0x15c0] sm:$0xff]
        %v1010 = vld [vmem:[%s218 + $0x15c8] sm:$0xff]
        %v1011 = vld [vmem:[%s218 + $0x15d0] sm:$0xff]
        %v1012 = vld [vmem:[%s218 + $0x15d8] sm:$0xff]
        %v1013 = vld [vmem:[%s218 + $0x15e0] sm:$0xff]
        %v1014 = vld [vmem:[%s218 + $0x15e8] sm:$0xff]
        %v1015 = vld [vmem:[%s218 + $0x15f0] sm:$0xff]
        %v1016 = vld [vmem:[%s218 + $0x15f8] sm:$0xff]
        %v1017 = vld [vmem:[%s218 + $0x1600] sm:$0xff]
        %v1018 = vld [vmem:[%s218 + $0x1608] sm:$0xff]
        %v1019 = vld [vmem:[%s218 + $0x1610] sm:$0xff]
        %v1020 = vld [vmem:[%s218 + $0x1618] sm:$0xff]
        %v1021 = vld [vmem:[%s218 + $0x1620] sm:$0xff]
        %v1022 = vld [vmem:[%s218 + $0x1628] sm:$0xff]
        %v1023 = vld [vmem:[%s218 + $0x1630] sm:$0xff]
        %v1024 = vld [vmem:[%s218 + $0x1638] sm:$0xff]
        %v1025 = vld [vmem:[%s218 + $0x1640] sm:$0xff]
        %v1026 = vld [vmem:[%s218 + $0x1648] sm:$0xff]
        %v1027 = vld [vmem:[%s218 + $0x1650] sm:$0xff]
        %v1028 = vld [vmem:[%s218 + $0x1658] sm:$0xff]
        %v1029 = vld [vmem:[%s218 + $0x1660] sm:$0xff]
        %v1030 = vld [vmem:[%s218 + $0x1668] sm:$0xff]
        %v1031 = vld [vmem:[%s218 + $0x1670] sm:$0xff]
        %v1032 = vld [vmem:[%s218 + $0x1678] sm:$0xff]
        %v1033 = vld [vmem:[%s218 + $0x1680] sm:$0xff]
        %v1034 = vld [vmem:[%s218 + $0x1688] sm:$0xff]
        %v1035 = vld [vmem:[%s218 + $0x1690] sm:$0xff]
        %v1036 = vld [vmem:[%s218 + $0x1698] sm:$0xff]
        %v1037 = vld [vmem:[%s218 + $0x16a0] sm:$0xff]
        %v1038 = vld [vmem:[%s218 + $0x16a8] sm:$0xff]
        %v1039 = vld [vmem:[%s218 + $0x16b0] sm:$0xff]
        %v1040 = vld [vmem:[%s218 + $0x16b8] sm:$0xff]
        %v1041 = vld [vmem:[%s218 + $0x16c0] sm:$0xff]
        %v1042 = vld [vmem:[%s218 + $0x16c8] sm:$0xff]
        %v1043 = vld [vmem:[%s218 + $0x16d0] sm:$0xff]
        %v1044 = vld [vmem:[%s218 + $0x16d8] sm:$0xff]
        %v1045 = vld [vmem:[%s218 + $0x16e0] sm:$0xff]
        %v1046 = vld [vmem:[%s218 + $0x16e8] sm:$0xff]
        %v1047 = vld [vmem:[%s218 + $0x16f0] sm:$0xff]
        %v1048 = vld [vmem:[%s218 + $0x16f8] sm:$0xff]
        %v1049 = vld [vmem:[%s218 + $0x1700] sm:$0xff]
        %v1050 = vld [vmem:[%s218 + $0x1708] sm:$0xff]
        %v1051 = vld [vmem:[%s218 + $0x1710] sm:$0xff]
        %v1052 = vld [vmem:[%s218 + $0x1718] sm:$0xff]
        %v1053 = vld [vmem:[%s218 + $0x1720] sm:$0xff]
        %v1054 = vld [vmem:[%s218 + $0x1728] sm:$0xff]
        %v1055 = vld [vmem:[%s218 + $0x1730] sm:$0xff]
        %v1056 = vld [vmem:[%s218 + $0x1738] sm:$0xff]
        %v1057 = vld [vmem:[%s218 + $0x1740] sm:$0xff]
        %v1058 = vld [vmem:[%s218 + $0x1748] sm:$0xff]
        %v1059 = vld [vmem:[%s218 + $0x1750] sm:$0xff]
        %v1060 = vld [vmem:[%s218 + $0x1758] sm:$0xff]
        %v1061 = vld [vmem:[%s218 + $0x1760] sm:$0xff]
        %v1062 = vld [vmem:[%s218 + $0x1768] sm:$0xff]
        %v1063 = vld [vmem:[%s218 + $0x1770] sm:$0xff]
        %v1064 = vld [vmem:[%s218 + $0x1778] sm:$0xff]
        %v1065 = vld [vmem:[%s218 + $0x1780] sm:$0xff]
        %v1066 = vld [vmem:[%s218 + $0x1788] sm:$0xff]
        %v1067 = vld [vmem:[%s218 + $0x1790] sm:$0xff]
        %v1068 = vld [vmem:[%s218 + $0x1798] sm:$0xff]
        %v1069 = vld [vmem:[%s218 + $0x17a0] sm:$0xff]
        %v1070 = vld [vmem:[%s218 + $0x17a8] sm:$0xff]
        %v1071 = vld [vmem:[%s218 + $0x17b0] sm:$0xff]
        %v1072 = vld [vmem:[%s218 + $0x17b8] sm:$0xff]
        %v1073 = vld [vmem:[%s218 + $0x17c0] sm:$0xff]
        %v1074 = vld [vmem:[%s218 + $0x17c8] sm:$0xff]
        %v1075 = vld [vmem:[%s218 + $0x17d0] sm:$0xff]
        %v1076 = vld [vmem:[%s218 + $0x17d8] sm:$0xff]
        %v1077 = vld [vmem:[%s218 + $0x17e0] sm:$0xff]
        %v1078 = vld [vmem:[%s218 + $0x17e8] sm:$0xff]
        %v1079 = vld [vmem:[%s218 + $0x17f0] sm:$0xff]
        %v1080 = vld [vmem:[%s218 + $0x17f8] sm:$0xff]
        %1081 = vmatprep.subr.mxu0 %v314
        %1082 = vmatpush1.msra.mxu0 %v313
        %1083 = vmatprep.subr.mxu0 %v317
        %1084 = vmatpush1.msra.mxu0 %v316
        %1085 = vmatprep.subr.mxu0 %v320
        %1086 = vmatpush1.msra.mxu0 %v319
        %1087 = vmatprep.subr.mxu0 %v323
        %1088 = vmatpush1.msra.mxu0 %v322
        %1089 = vmatprep.subr.mxu0 %v326
        %1090 = vmatpush1.msra.mxu0 %v325
        %1091 = vmatprep.subr.mxu0 %v329
        %1092 = vmatpush1.msra.mxu0 %v328
        %1093 = vmatprep.subr.mxu0 %v332
        %1094 = vmatpush1.msra.mxu0 %v331
        %1095 = vmatprep.subr.mxu0 %v335
        %1096 = vmatpush1.msra.mxu0 %v334
        %1097 = vmatprep.subr.mxu0 %v338
        %1098 = vmatpush1.msra.mxu0 %v337
        %1099 = vmatprep.subr.mxu0 %v341
        %1100 = vmatpush1.msra.mxu0 %v340
        %1101 = vmatprep.subr.mxu0 %v344
        %1102 = vmatpush1.msra.mxu0 %v343
        %1103 = vmatprep.subr.mxu0 %v347
        %1104 = vmatpush1.msra.mxu0 %v346
        %1105 = vmatprep.subr.mxu0 %v350
        %1106 = vmatpush1.msra.mxu0 %v349
        %1107 = vmatprep.subr.mxu0 %v353
        %1108 = vmatpush1.msra.mxu0 %v352
        %1109 = vmatprep.subr.mxu0 %v356
        %1110 = vmatpush1.msra.mxu0 %v355
        %1111 = vmatprep.subr.mxu0 %v359
        %1112 = vmatpush1.msra.mxu0 %v358
        %1113 = vmatprep.subr.mxu0 %v362
        %1114 = vmatpush1.msra.mxu0 %v361
        %1115 = vmatprep.subr.mxu0 %v365
        %1116 = vmatpush1.msra.mxu0 %v364
        %1117 = vmatprep.subr.mxu0 %v368
        %1118 = vmatpush1.msra.mxu0 %v367
        %1119 = vmatprep.subr.mxu0 %v371
        %1120 = vmatpush1.msra.mxu0 %v370
        %1121 = vmatprep.subr.mxu0 %v374
        %1122 = vmatpush1.msra.mxu0 %v373
        %1123 = vmatprep.subr.mxu0 %v377
        %1124 = vmatpush1.msra.mxu0 %v376
        %1125 = vmatprep.subr.mxu0 %v380
        %1126 = vmatpush1.msra.mxu0 %v379
        %1127 = vmatprep.subr.mxu0 %v383
        %1128 = vmatpush1.msra.mxu0 %v382
        %1129 = vmatprep.subr.mxu0 %v386
        %1130 = vmatpush1.msra.mxu0 %v385
        %1131 = vmatprep.subr.mxu0 %v389
        %1132 = vmatpush1.msra.mxu0 %v388
        %1133 = vmatprep.subr.mxu0 %v392
        %1134 = vmatpush1.msra.mxu0 %v391
        %1135 = vmatprep.subr.mxu0 %v395
        %1136 = vmatpush1.msra.mxu0 %v394
        %1137 = vmatprep.subr.mxu0 %v398
        %1138 = vmatpush1.msra.mxu0 %v397
        %1139 = vmatprep.subr.mxu0 %v401
        %1140 = vmatpush1.msra.mxu0 %v400
        %1141 = vmatprep.subr.mxu0 %v404
        %1142 = vmatpush1.msra.mxu0 %v403
        %1143 = vmatprep.subr.mxu0 %v407
        %1144 = vmatpush1.msra.mxu0 %v406
        %1145 = vmatprep.mubr.f32.mxu0 %v298
        %1146 = vmatmul.mubr.f32.gmra.mrb[0].mxu0 %v297
        %v1147 = vpop.f32.mrb[0].mxu0
        %v1148 = vadd.f32 0.0, %v1147
        %v1149 = vpop.f32.mrb[0].mxu0
        %v1150 = vadd.f32 0.0, %v1149
        %1151 = vdwg.mxu0
        %1152 = vmatprep.subr.mxu0 %v410
        %1153 = vmatpush1.msra.mxu0 %v409
        %1154 = vmatprep.subr.mxu0 %v413
        %1155 = vmatpush1.msra.mxu0 %v412
        %1156 = vmatprep.subr.mxu0 %v416
        %1157 = vmatpush1.msra.mxu0 %v415
        %1158 = vmatprep.subr.mxu0 %v419
        %1159 = vmatpush1.msra.mxu0 %v418
        %1160 = vmatprep.subr.mxu0 %v422
        %1161 = vmatpush1.msra.mxu0 %v421
        %1162 = vmatprep.subr.mxu0 %v425
        %1163 = vmatpush1.msra.mxu0 %v424
        %1164 = vmatprep.subr.mxu0 %v428
        %1165 = vmatpush1.msra.mxu0 %v427
        %1166 = vmatprep.subr.mxu0 %v431
        %1167 = vmatpush1.msra.mxu0 %v430
        %1168 = vmatprep.subr.mxu0 %v434
        %1169 = vmatpush1.msra.mxu0 %v433
        %1170 = vmatprep.subr.mxu0 %v437
        %1171 = vmatpush1.msra.mxu0 %v436
        %1172 = vmatprep.subr.mxu0 %v440
        %1173 = vmatpush1.msra.mxu0 %v439
        %1174 = vmatprep.subr.mxu0 %v443
        %1175 = vmatpush1.msra.mxu0 %v442
        %1176 = vmatprep.subr.mxu0 %v446
        %1177 = vmatpush1.msra.mxu0 %v445
        %1178 = vmatprep.subr.mxu0 %v449
        %1179 = vmatpush1.msra.mxu0 %v448
        %1180 = vmatprep.subr.mxu0 %v452
        %1181 = vmatpush1.msra.mxu0 %v451
        %1182 = vmatprep.subr.mxu0 %v455
        %1183 = vmatpush1.msra.mxu0 %v454
        %1184 = vmatprep.subr.mxu0 %v458
        %1185 = vmatpush1.msra.mxu0 %v457
        %1186 = vmatprep.subr.mxu0 %v461
        %1187 = vmatpush1.msra.mxu0 %v460
        %1188 = vmatprep.subr.mxu0 %v464
        %1189 = vmatpush1.msra.mxu0 %v463
        %1190 = vmatprep.subr.mxu0 %v467
        %1191 = vmatpush1.msra.mxu0 %v466
        %1192 = vmatprep.subr.mxu0 %v470
        %1193 = vmatpush1.msra.mxu0 %v469
        %1194 = vmatprep.subr.mxu0 %v473
        %1195 = vmatpush1.msra.mxu0 %v472
        %1196 = vmatprep.subr.mxu0 %v476
        %1197 = vmatpush1.msra.mxu0 %v475
        %1198 = vmatprep.subr.mxu0 %v479
        %1199 = vmatpush1.msra.mxu0 %v478
        %1200 = vmatprep.subr.mxu0 %v482
        %1201 = vmatpush1.msra.mxu0 %v481
        %1202 = vmatprep.subr.mxu0 %v485
        %1203 = vmatpush1.msra.mxu0 %v484
        %1204 = vmatprep.subr.mxu0 %v488
        %1205 = vmatpush1.msra.mxu0 %v487
        %1206 = vmatprep.subr.mxu0 %v491
        %1207 = vmatpush1.msra.mxu0 %v490
        %1208 = vmatprep.subr.mxu0 %v494
        %1209 = vmatpush1.msra.mxu0 %v493
        %1210 = vmatprep.subr.mxu0 %v497
        %1211 = vmatpush1.msra.mxu0 %v496
        %1212 = vmatprep.subr.mxu0 %v500
        %1213 = vmatpush1.msra.mxu0 %v499
        %1214 = vmatprep.subr.mxu0 %v503
        %1215 = vmatpush1.msra.mxu0 %v502
        %1216 = vmatprep.mubr.f32.mxu0 %v300
        %1217 = vmatmul.mubr.f32.gmra.mrb[0].mxu0 %v299
        %v1218 = vpop.f32.mrb[0].mxu0
        %v1219 = vadd.f32 %v1148, %v1218
        %v1220 = vpop.f32.mrb[0].mxu0
        %v1221 = vadd.f32 %v1150, %v1220
        %1222 = vdwg.mxu0
        %1223 = vmatprep.subr.mxu0 %v506
        %1224 = vmatpush1.msra.mxu0 %v505
        %1225 = vmatprep.subr.mxu0 %v509
        %1226 = vmatpush1.msra.mxu0 %v508
        %1227 = vmatprep.subr.mxu0 %v512
        %1228 = vmatpush1.msra.mxu0 %v511
        %1229 = vmatprep.subr.mxu0 %v515
        %1230 = vmatpush1.msra.mxu0 %v514
        %1231 = vmatprep.subr.mxu0 %v518
        %1232 = vmatpush1.msra.mxu0 %v517
        %1233 = vmatprep.subr.mxu0 %v521
        %1234 = vmatpush1.msra.mxu0 %v520
        %1235 = vmatprep.subr.mxu0 %v524
        %1236 = vmatpush1.msra.mxu0 %v523
        %1237 = vmatprep.subr.mxu0 %v527
        %1238 = vmatpush1.msra.mxu0 %v526
        %1239 = vmatprep.subr.mxu0 %v530
        %1240 = vmatpush1.msra.mxu0 %v529
        %1241 = vmatprep.subr.mxu0 %v533
        %1242 = vmatpush1.msra.mxu0 %v532
        %1243 = vmatprep.subr.mxu0 %v536
        %1244 = vmatpush1.msra.mxu0 %v535
        %1245 = vmatprep.subr.mxu0 %v539
        %1246 = vmatpush1.msra.mxu0 %v538
        %1247 = vmatprep.subr.mxu0 %v542
        %1248 = vmatpush1.msra.mxu0 %v541
        %1249 = vmatprep.subr.mxu0 %v545
        %1250 = vmatpush1.msra.mxu0 %v544
        %1251 = vmatprep.subr.mxu0 %v548
        %1252 = vmatpush1.msra.mxu0 %v547
        %1253 = vmatprep.subr.mxu0 %v551
        %1254 = vmatpush1.msra.mxu0 %v550
        %1255 = vmatprep.subr.mxu0 %v554
        %1256 = vmatpush1.msra.mxu0 %v553
        %1257 = vmatprep.subr.mxu0 %v557
        %1258 = vmatpush1.msra.mxu0 %v556
        %1259 = vmatprep.subr.mxu0 %v560
        %1260 = vmatpush1.msra.mxu0 %v559
        %1261 = vmatprep.subr.mxu0 %v563
        %1262 = vmatpush1.msra.mxu0 %v562
        %1263 = vmatprep.subr.mxu0 %v566
        %1264 = vmatpush1.msra.mxu0 %v565
        %1265 = vmatprep.subr.mxu0 %v569
        %1266 = vmatpush1.msra.mxu0 %v568
        %1267 = vmatprep.subr.mxu0 %v572
        %1268 = vmatpush1.msra.mxu0 %v571
        %1269 = vmatprep.subr.mxu0 %v575
        %1270 = vmatpush1.msra.mxu0 %v574
        %1271 = vmatprep.subr.mxu0 %v578
        %1272 = vmatpush1.msra.mxu0 %v577
        %1273 = vmatprep.subr.mxu0 %v581
        %1274 = vmatpush1.msra.mxu0 %v580
        %1275 = vmatprep.subr.mxu0 %v584
        %1276 = vmatpush1.msra.mxu0 %v583
        %1277 = vmatprep.subr.mxu0 %v587
        %1278 = vmatpush1.msra.mxu0 %v586
        %1279 = vmatprep.subr.mxu0 %v590
        %1280 = vmatpush1.msra.mxu0 %v589
        %1281 = vmatprep.subr.mxu0 %v593
        %1282 = vmatpush1.msra.mxu0 %v592
        %1283 = vmatprep.subr.mxu0 %v596
        %1284 = vmatpush1.msra.mxu0 %v595
        %1285 = vmatprep.subr.mxu0 %v599
        %1286 = vmatpush1.msra.mxu0 %v598
        %1287 = vmatprep.mubr.f32.mxu0 %v302
        %1288 = vmatmul.mubr.f32.gmra.mrb[0].mxu0 %v301
        %v1289 = vpop.f32.mrb[0].mxu0
        %v1290 = vadd.f32 %v1219, %v1289
        %v1291 = vpop.f32.mrb[0].mxu0
        %v1292 = vadd.f32 %v1221, %v1291
        %1293 = vdwg.mxu0
        %1294 = vmatprep.subr.mxu0 %v602
        %1295 = vmatpush1.msra.mxu0 %v601
        %1296 = vmatprep.subr.mxu0 %v605
        %1297 = vmatpush1.msra.mxu0 %v604
        %1298 = vmatprep.subr.mxu0 %v608
        %1299 = vmatpush1.msra.mxu0 %v607
        %1300 = vmatprep.subr.mxu0 %v611
        %1301 = vmatpush1.msra.mxu0 %v610
        %1302 = vmatprep.subr.mxu0 %v614
        %1303 = vmatpush1.msra.mxu0 %v613
        %1304 = vmatprep.subr.mxu0 %v617
        %1305 = vmatpush1.msra.mxu0 %v616
        %1306 = vmatprep.subr.mxu0 %v620
        %1307 = vmatpush1.msra.mxu0 %v619
        %1308 = vmatprep.subr.mxu0 %v623
        %1309 = vmatpush1.msra.mxu0 %v622
        %1310 = vmatprep.subr.mxu0 %v626
        %1311 = vmatpush1.msra.mxu0 %v625
        %1312 = vmatprep.subr.mxu0 %v629
        %1313 = vmatpush1.msra.mxu0 %v628
        %1314 = vmatprep.subr.mxu0 %v632
        %1315 = vmatpush1.msra.mxu0 %v631
        %1316 = vmatprep.subr.mxu0 %v635
        %1317 = vmatpush1.msra.mxu0 %v634
        %1318 = vmatprep.subr.mxu0 %v638
        %1319 = vmatpush1.msra.mxu0 %v637
        %1320 = vmatprep.subr.mxu0 %v641
        %1321 = vmatpush1.msra.mxu0 %v640
        %1322 = vmatprep.subr.mxu0 %v644
        %1323 = vmatpush1.msra.mxu0 %v643
        %1324 = vmatprep.subr.mxu0 %v647
        %1325 = vmatpush1.msra.mxu0 %v646
        %1326 = vmatprep.subr.mxu0 %v650
        %1327 = vmatpush1.msra.mxu0 %v649
        %1328 = vmatprep.subr.mxu0 %v653
        %1329 = vmatpush1.msra.mxu0 %v652
        %1330 = vmatprep.subr.mxu0 %v656
        %1331 = vmatpush1.msra.mxu0 %v655
        %1332 = vmatprep.subr.mxu0 %v659
        %1333 = vmatpush1.msra.mxu0 %v658
        %1334 = vmatprep.subr.mxu0 %v662
        %1335 = vmatpush1.msra.mxu0 %v661
        %1336 = vmatprep.subr.mxu0 %v665
        %1337 = vmatpush1.msra.mxu0 %v664
        %1338 = vmatprep.subr.mxu0 %v668
        %1339 = vmatpush1.msra.mxu0 %v667
        %1340 = vmatprep.subr.mxu0 %v671
        %1341 = vmatpush1.msra.mxu0 %v670
        %1342 = vmatprep.subr.mxu0 %v674
        %1343 = vmatpush1.msra.mxu0 %v673
        %1344 = vmatprep.subr.mxu0 %v677
        %1345 = vmatpush1.msra.mxu0 %v676
        %1346 = vmatprep.subr.mxu0 %v680
        %1347 = vmatpush1.msra.mxu0 %v679
        %1348 = vmatprep.subr.mxu0 %v683
        %1349 = vmatpush1.msra.mxu0 %v682
        %1350 = vmatprep.subr.mxu0 %v686
        %1351 = vmatpush1.msra.mxu0 %v685
        %1352 = vmatprep.subr.mxu0 %v689
        %1353 = vmatpush1.msra.mxu0 %v688
        %1354 = vmatprep.subr.mxu0 %v692
        %1355 = vmatpush1.msra.mxu0 %v691
        %1356 = vmatprep.subr.mxu0 %v695
        %1357 = vmatpush1.msra.mxu0 %v694
        %1358 = vmatprep.mubr.f32.mxu0 %v304
        %1359 = vmatmul.mubr.f32.gmra.mrb[0].mxu0 %v303
        %v1360 = vpop.f32.mrb[0].mxu0
        %v1361 = vadd.f32 %v1290, %v1360
        %v1362 = vpop.f32.mrb[0].mxu0
        %v1363 = vadd.f32 %v1292, %v1362
        %1364 = vdwg.mxu0
        %1365 = vmatprep.subr.mxu0 %v698
        %1366 = vmatpush1.msra.mxu0 %v697
        %1367 = vmatprep.subr.mxu0 %v701
        %1368 = vmatpush1.msra.mxu0 %v700
        %1369 = vmatprep.subr.mxu0 %v704
        %1370 = vmatpush1.msra.mxu0 %v703
        %1371 = vmatprep.subr.mxu0 %v707
        %1372 = vmatpush1.msra.mxu0 %v706
        %1373 = vmatprep.subr.mxu0 %v710
        %1374 = vmatpush1.msra.mxu0 %v709
        %1375 = vmatprep.subr.mxu0 %v713
        %1376 = vmatpush1.msra.mxu0 %v712
        %1377 = vmatprep.subr.mxu0 %v716
        %1378 = vmatpush1.msra.mxu0 %v715
        %1379 = vmatprep.subr.mxu0 %v719
        %1380 = vmatpush1.msra.mxu0 %v718
        %1381 = vmatprep.subr.mxu0 %v722
        %1382 = vmatpush1.msra.mxu0 %v721
        %1383 = vmatprep.subr.mxu0 %v725
        %1384 = vmatpush1.msra.mxu0 %v724
        %1385 = vmatprep.subr.mxu0 %v728
        %1386 = vmatpush1.msra.mxu0 %v727
        %1387 = vmatprep.subr.mxu0 %v731
        %1388 = vmatpush1.msra.mxu0 %v730
        %1389 = vmatprep.subr.mxu0 %v734
        %1390 = vmatpush1.msra.mxu0 %v733
        %1391 = vmatprep.subr.mxu0 %v737
        %1392 = vmatpush1.msra.mxu0 %v736
        %1393 = vmatprep.subr.mxu0 %v740
        %1394 = vmatpush1.msra.mxu0 %v739
        %1395 = vmatprep.subr.mxu0 %v743
        %1396 = vmatpush1.msra.mxu0 %v742
        %1397 = vmatprep.subr.mxu0 %v746
        %1398 = vmatpush1.msra.mxu0 %v745
        %1399 = vmatprep.subr.mxu0 %v749
        %1400 = vmatpush1.msra.mxu0 %v748
        %1401 = vmatprep.subr.mxu0 %v752
        %1402 = vmatpush1.msra.mxu0 %v751
        %1403 = vmatprep.subr.mxu0 %v755
        %1404 = vmatpush1.msra.mxu0 %v754
        %1405 = vmatprep.subr.mxu0 %v758
        %1406 = vmatpush1.msra.mxu0 %v757
        %1407 = vmatprep.subr.mxu0 %v761
        %1408 = vmatpush1.msra.mxu0 %v760
        %1409 = vmatprep.subr.mxu0 %v764
        %1410 = vmatpush1.msra.mxu0 %v763
        %1411 = vmatprep.subr.mxu0 %v767
        %1412 = vmatpush1.msra.mxu0 %v766
        %1413 = vmatprep.subr.mxu0 %v770
        %1414 = vmatpush1.msra.mxu0 %v769
        %1415 = vmatprep.subr.mxu0 %v773
        %1416 = vmatpush1.msra.mxu0 %v772
        %1417 = vmatprep.subr.mxu0 %v776
        %1418 = vmatpush1.msra.mxu0 %v775
        %1419 = vmatprep.subr.mxu0 %v779
        %1420 = vmatpush1.msra.mxu0 %v778
        %1421 = vmatprep.subr.mxu0 %v782
        %1422 = vmatpush1.msra.mxu0 %v781
        %1423 = vmatprep.subr.mxu0 %v785
        %1424 = vmatpush1.msra.mxu0 %v784
        %1425 = vmatprep.subr.mxu0 %v788
        %1426 = vmatpush1.msra.mxu0 %v787
        %1427 = vmatprep.subr.mxu0 %v791
        %1428 = vmatpush1.msra.mxu0 %v790
        %1429 = vmatprep.mubr.f32.mxu0 %v306
        %1430 = vmatmul.mubr.f32.gmra.mrb[0].mxu0 %v305
        %v1431 = vpop.f32.mrb[0].mxu0
        %v1432 = vadd.f32 %v1361, %v1431
        %v1433 = vpop.f32.mrb[0].mxu0
        %v1434 = vadd.f32 %v1363, %v1433
        %1435 = vdwg.mxu0
        %1436 = vmatprep.subr.mxu0 %v794
        %1437 = vmatpush1.msra.mxu0 %v793
        %1438 = vmatprep.subr.mxu0 %v797
        %1439 = vmatpush1.msra.mxu0 %v796
        %1440 = vmatprep.subr.mxu0 %v800
        %1441 = vmatpush1.msra.mxu0 %v799
        %1442 = vmatprep.subr.mxu0 %v803
        %1443 = vmatpush1.msra.mxu0 %v802
        %1444 = vmatprep.subr.mxu0 %v806
        %1445 = vmatpush1.msra.mxu0 %v805
        %1446 = vmatprep.subr.mxu0 %v809
        %1447 = vmatpush1.msra.mxu0 %v808
        %1448 = vmatprep.subr.mxu0 %v812
        %1449 = vmatpush1.msra.mxu0 %v811
        %1450 = vmatprep.subr.mxu0 %v815
        %1451 = vmatpush1.msra.mxu0 %v814
        %1452 = vmatprep.subr.mxu0 %v818
        %1453 = vmatpush1.msra.mxu0 %v817
        %1454 = vmatprep.subr.mxu0 %v821
        %1455 = vmatpush1.msra.mxu0 %v820
        %1456 = vmatprep.subr.mxu0 %v824
        %1457 = vmatpush1.msra.mxu0 %v823
        %1458 = vmatprep.subr.mxu0 %v827
        %1459 = vmatpush1.msra.mxu0 %v826
        %1460 = vmatprep.subr.mxu0 %v830
        %1461 = vmatpush1.msra.mxu0 %v829
        %1462 = vmatprep.subr.mxu0 %v833
        %1463 = vmatpush1.msra.mxu0 %v832
        %1464 = vmatprep.subr.mxu0 %v836
        %1465 = vmatpush1.msra.mxu0 %v835
        %1466 = vmatprep.subr.mxu0 %v839
        %1467 = vmatpush1.msra.mxu0 %v838
        %1468 = vmatprep.subr.mxu0 %v842
        %1469 = vmatpush1.msra.mxu0 %v841
        %1470 = vmatprep.subr.mxu0 %v845
        %1471 = vmatpush1.msra.mxu0 %v844
        %1472 = vmatprep.subr.mxu0 %v848
        %1473 = vmatpush1.msra.mxu0 %v847
        %1474 = vmatprep.subr.mxu0 %v851
        %1475 = vmatpush1.msra.mxu0 %v850
        %1476 = vmatprep.subr.mxu0 %v854
        %1477 = vmatpush1.msra.mxu0 %v853
        %1478 = vmatprep.subr.mxu0 %v857
        %1479 = vmatpush1.msra.mxu0 %v856
        %1480 = vmatprep.subr.mxu0 %v860
        %1481 = vmatpush1.msra.mxu0 %v859
        %1482 = vmatprep.subr.mxu0 %v863
        %1483 = vmatpush1.msra.mxu0 %v862
        %1484 = vmatprep.subr.mxu0 %v866
        %1485 = vmatpush1.msra.mxu0 %v865
        %1486 = vmatprep.subr.mxu0 %v869
        %1487 = vmatpush1.msra.mxu0 %v868
        %1488 = vmatprep.subr.mxu0 %v872
        %1489 = vmatpush1.msra.mxu0 %v871
        %1490 = vmatprep.subr.mxu0 %v875
        %1491 = vmatpush1.msra.mxu0 %v874
        %1492 = vmatprep.subr.mxu0 %v878
        %1493 = vmatpush1.msra.mxu0 %v877
        %1494 = vmatprep.subr.mxu0 %v881
        %1495 = vmatpush1.msra.mxu0 %v880
        %1496 = vmatprep.subr.mxu0 %v884
        %1497 = vmatpush1.msra.mxu0 %v883
        %1498 = vmatprep.subr.mxu0 %v887
        %1499 = vmatpush1.msra.mxu0 %v886
        %1500 = vmatprep.mubr.f32.mxu0 %v308
        %1501 = vmatmul.mubr.f32.gmra.mrb[0].mxu0 %v307
        %v1502 = vpop.f32.mrb[0].mxu0
        %v1503 = vadd.f32 %v1432, %v1502
        %v1504 = vpop.f32.mrb[0].mxu0
        %v1505 = vadd.f32 %v1434, %v1504
        %1506 = vdwg.mxu0
        %1507 = vmatprep.subr.mxu0 %v890
        %1508 = vmatpush1.msra.mxu0 %v889
        %1509 = vmatprep.subr.mxu0 %v893
        %1510 = vmatpush1.msra.mxu0 %v892
        %1511 = vmatprep.subr.mxu0 %v896
        %1512 = vmatpush1.msra.mxu0 %v895
        %1513 = vmatprep.subr.mxu0 %v899
        %1514 = vmatpush1.msra.mxu0 %v898
        %1515 = vmatprep.subr.mxu0 %v902
        %1516 = vmatpush1.msra.mxu0 %v901
        %1517 = vmatprep.subr.mxu0 %v905
        %1518 = vmatpush1.msra.mxu0 %v904
        %1519 = vmatprep.subr.mxu0 %v908
        %1520 = vmatpush1.msra.mxu0 %v907
        %1521 = vmatprep.subr.mxu0 %v911
        %1522 = vmatpush1.msra.mxu0 %v910
        %1523 = vmatprep.subr.mxu0 %v914
        %1524 = vmatpush1.msra.mxu0 %v913
        %1525 = vmatprep.subr.mxu0 %v917
        %1526 = vmatpush1.msra.mxu0 %v916
        %1527 = vmatprep.subr.mxu0 %v920
        %1528 = vmatpush1.msra.mxu0 %v919
        %1529 = vmatprep.subr.mxu0 %v923
        %1530 = vmatpush1.msra.mxu0 %v922
        %1531 = vmatprep.subr.mxu0 %v926
        %1532 = vmatpush1.msra.mxu0 %v925
        %1533 = vmatprep.subr.mxu0 %v929
        %1534 = vmatpush1.msra.mxu0 %v928
        %1535 = vmatprep.subr.mxu0 %v932
        %1536 = vmatpush1.msra.mxu0 %v931
        %1537 = vmatprep.subr.mxu0 %v935
        %1538 = vmatpush1.msra.mxu0 %v934
        %1539 = vmatprep.subr.mxu0 %v938
        %1540 = vmatpush1.msra.mxu0 %v937
        %1541 = vmatprep.subr.mxu0 %v941
        %1542 = vmatpush1.msra.mxu0 %v940
        %1543 = vmatprep.subr.mxu0 %v944
        %1544 = vmatpush1.msra.mxu0 %v943
        %1545 = vmatprep.subr.mxu0 %v947
        %1546 = vmatpush1.msra.mxu0 %v946
        %1547 = vmatprep.subr.mxu0 %v950
        %1548 = vmatpush1.msra.mxu0 %v949
        %1549 = vmatprep.subr.mxu0 %v953
        %1550 = vmatpush1.msra.mxu0 %v952
        %1551 = vmatprep.subr.mxu0 %v956
        %1552 = vmatpush1.msra.mxu0 %v955
        %1553 = vmatprep.subr.mxu0 %v959
        %1554 = vmatpush1.msra.mxu0 %v958
        %1555 = vmatprep.subr.mxu0 %v962
        %1556 = vmatpush1.msra.mxu0 %v961
        %1557 = vmatprep.subr.mxu0 %v965
        %1558 = vmatpush1.msra.mxu0 %v964
        %1559 = vmatprep.subr.mxu0 %v968
        %1560 = vmatpush1.msra.mxu0 %v967
        %1561 = vmatprep.subr.mxu0 %v971
        %1562 = vmatpush1.msra.mxu0 %v970
        %1563 = vmatprep.subr.mxu0 %v974
        %1564 = vmatpush1.msra.mxu0 %v973
        %1565 = vmatprep.subr.mxu0 %v977
        %1566 = vmatpush1.msra.mxu0 %v976
        %1567 = vmatprep.subr.mxu0 %v980
        %1568 = vmatpush1.msra.mxu0 %v979
        %1569 = vmatprep.subr.mxu0 %v983
        %1570 = vmatpush1.msra.mxu0 %v982
        %1571 = vmatprep.mubr.f32.mxu0 %v310
        %1572 = vmatmul.mubr.f32.gmra.mrb[0].mxu0 %v309
        %v1573 = vpop.f32.mrb[0].mxu0
        %v1574 = vadd.f32 %v1503, %v1573
        %v1575 = vpop.f32.mrb[0].mxu0
        %v1576 = vadd.f32 %v1505, %v1575
        %1577 = vdwg.mxu0
        %1578 = vmatprep.subr.mxu0 %v986
        %1579 = vmatpush1.msra.mxu0 %v985
        %1580 = vmatprep.subr.mxu0 %v989
        %1581 = vmatpush1.msra.mxu0 %v988
        %1582 = vmatprep.subr.mxu0 %v992
        %1583 = vmatpush1.msra.mxu0 %v991
        %1584 = vmatprep.subr.mxu0 %v995
        %1585 = vmatpush1.msra.mxu0 %v994
        %1586 = vmatprep.subr.mxu0 %v998
        %1587 = vmatpush1.msra.mxu0 %v997
        %1588 = vmatprep.subr.mxu0 %v1001
        %1589 = vmatpush1.msra.mxu0 %v1000
        %1590 = vmatprep.subr.mxu0 %v1004
        %1591 = vmatpush1.msra.mxu0 %v1003
        %1592 = vmatprep.subr.mxu0 %v1007
        %1593 = vmatpush1.msra.mxu0 %v1006
        %1594 = vmatprep.subr.mxu0 %v1010
        %1595 = vmatpush1.msra.mxu0 %v1009
        %1596 = vmatprep.subr.mxu0 %v1013
        %1597 = vmatpush1.msra.mxu0 %v1012
        %1598 = vmatprep.subr.mxu0 %v1016
        %1599 = vmatpush1.msra.mxu0 %v1015
        %1600 = vmatprep.subr.mxu0 %v1019
        %1601 = vmatpush1.msra.mxu0 %v1018
        %1602 = vmatprep.subr.mxu0 %v1022
        %1603 = vmatpush1.msra.mxu0 %v1021
        %1604 = vmatprep.subr.mxu0 %v1025
        %1605 = vmatpush1.msra.mxu0 %v1024
        %1606 = vmatprep.subr.mxu0 %v1028
        %1607 = vmatpush1.msra.mxu0 %v1027
        %1608 = vmatprep.subr.mxu0 %v1031
        %1609 = vmatpush1.msra.mxu0 %v1030
        %1610 = vmatprep.subr.mxu0 %v1034
        %1611 = vmatpush1.msra.mxu0 %v1033
        %1612 = vmatprep.subr.mxu0 %v1037
        %1613 = vmatpush1.msra.mxu0 %v1036
        %1614 = vmatprep.subr.mxu0 %v1040
        %1615 = vmatpush1.msra.mxu0 %v1039
        %1616 = vmatprep.subr.mxu0 %v1043
        %1617 = vmatpush1.msra.mxu0 %v1042
        %1618 = vmatprep.subr.mxu0 %v1046
        %1619 = vmatpush1.msra.mxu0 %v1045
        %1620 = vmatprep.subr.mxu0 %v1049
        %1621 = vmatpush1.msra.mxu0 %v1048
        %1622 = vmatprep.subr.mxu0 %v1052
        %1623 = vmatpush1.msra.mxu0 %v1051
        %1624 = vmatprep.subr.mxu0 %v1055
        %1625 = vmatpush1.msra.mxu0 %v1054
        %1626 = vmatprep.subr.mxu0 %v1058
        %1627 = vmatpush1.msra.mxu0 %v1057
        %1628 = vmatprep.subr.mxu0 %v1061
        %1629 = vmatpush1.msra.mxu0 %v1060
        %1630 = vmatprep.subr.mxu0 %v1064
        %1631 = vmatpush1.msra.mxu0 %v1063
        %1632 = vmatprep.subr.mxu0 %v1067
        %1633 = vmatpush1.msra.mxu0 %v1066
        %1634 = vmatprep.subr.mxu0 %v1070
        %1635 = vmatpush1.msra.mxu0 %v1069
        %1636 = vmatprep.subr.mxu0 %v1073
        %1637 = vmatpush1.msra.mxu0 %v1072
        %1638 = vmatprep.subr.mxu0 %v1076
        %1639 = vmatpush1.msra.mxu0 %v1075
        %1640 = vmatprep.subr.mxu0 %v1079
        %1641 = vmatpush1.msra.mxu0 %v1078
        %1642 = vmatprep.mubr.f32.mxu0 %v312
        %1643 = vmatmul.mubr.f32.gmra.mrb[0].mxu0 %v311
        %v1644 = vpop.f32.mrb[0].mxu0
        %v1645 = vadd.f32 %v1574, %v1644
        %v1646 = vpop.f32.mrb[0].mxu0
        %v1647 = vadd.f32 %v1576, %v1646
        %1648 = vdwg.mxu0
        %1649 = vmatprep.subr.mxu0 0.0
        %1650 = vmatpush1.msra.mxu0 %v315
        %1651 = vmatprep.subr.mxu0 0.0
        %1652 = vmatpush1.msra.mxu0 %v318
        %1653 = vmatprep.subr.mxu0 0.0
        %1654 = vmatpush1.msra.mxu0 %v321
        %1655 = vmatprep.subr.mxu0 0.0
        %1656 = vmatpush1.msra.mxu0 %v324
        %1657 = vmatprep.subr.mxu0 0.0
        %1658 = vmatpush1.msra.mxu0 %v327
        %1659 = vmatprep.subr.mxu0 0.0
        %1660 = vmatpush1.msra.mxu0 %v330
        %1661 = vmatprep.subr.mxu0 0.0
        %1662 = vmatpush1.msra.mxu0 %v333
        %1663 = vmatprep.subr.mxu0 0.0
        %1664 = vmatpush1.msra.mxu0 %v336
        %1665 = vmatprep.subr.mxu0 0.0
        %1666 = vmatpush1.msra.mxu0 %v339
        %1667 = vmatprep.subr.mxu0 0.0
        %1668 = vmatpush1.msra.mxu0 %v342
        %1669 = vmatprep.subr.mxu0 0.0
        %1670 = vmatpush1.msra.mxu0 %v345
        %1671 = vmatprep.subr.mxu0 0.0
        %1672 = vmatpush1.msra.mxu0 %v348
        %1673 = vmatprep.subr.mxu0 0.0
        %1674 = vmatpush1.msra.mxu0 %v351
        %1675 = vmatprep.subr.mxu0 0.0
        %1676 = vmatpush1.msra.mxu0 %v354
        %1677 = vmatprep.subr.mxu0 0.0
        %1678 = vmatpush1.msra.mxu0 %v357
        %1679 = vmatprep.subr.mxu0 0.0
        %1680 = vmatpush1.msra.mxu0 %v360
        %1681 = vmatprep.subr.mxu0 0.0
        %1682 = vmatpush1.msra.mxu0 %v363
        %1683 = vmatprep.subr.mxu0 0.0
        %1684 = vmatpush1.msra.mxu0 %v366
        %1685 = vmatprep.subr.mxu0 0.0
        %1686 = vmatpush1.msra.mxu0 %v369
        %1687 = vmatprep.subr.mxu0 0.0
        %1688 = vmatpush1.msra.mxu0 %v372
        %1689 = vmatprep.subr.mxu0 0.0
        %1690 = vmatpush1.msra.mxu0 %v375
        %1691 = vmatprep.subr.mxu0 0.0
        %1692 = vmatpush1.msra.mxu0 %v378
        %1693 = vmatprep.subr.mxu0 0.0
        %1694 = vmatpush1.msra.mxu0 %v381
        %1695 = vmatprep.subr.mxu0 0.0
        %1696 = vmatpush1.msra.mxu0 %v384
        %1697 = vmatprep.subr.mxu0 0.0
        %1698 = vmatpush1.msra.mxu0 %v387
        %1699 = vmatprep.subr.mxu0 0.0
        %1700 = vmatpush1.msra.mxu0 %v390
        %1701 = vmatprep.subr.mxu0 0.0
        %1702 = vmatpush1.msra.mxu0 %v393
        %1703 = vmatprep.subr.mxu0 0.0
        %1704 = vmatpush1.msra.mxu0 %v396
        %1705 = vmatprep.subr.mxu0 0.0
        %1706 = vmatpush1.msra.mxu0 %v399
        %1707 = vmatprep.subr.mxu0 0.0
        %1708 = vmatpush1.msra.mxu0 %v402
        %1709 = vmatprep.subr.mxu0 0.0
        %1710 = vmatpush1.msra.mxu0 %v405
        %1711 = vmatprep.subr.mxu0 0.0
        %1712 = vmatpush1.msra.mxu0 %v408
        %1713 = vmatprep.mubr.f32.mxu0 %v298
        %1714 = vmatmul.mubr.f32.gmra.mrb[0].mxu0 %v297
        %v1715 = vpop.f32.mrb[0].mxu0
        %v1716 = vadd.f32 0.0, %v1715
        %v1717 = vpop.f32.mrb[0].mxu0
        %1718 = vdwg.mxu0
        %1719 = vmatprep.subr.mxu0 0.0
        %1720 = vmatpush1.msra.mxu0 %v411
        %1721 = vmatprep.subr.mxu0 0.0
        %1722 = vmatpush1.msra.mxu0 %v414
        %1723 = vmatprep.subr.mxu0 0.0
        %1724 = vmatpush1.msra.mxu0 %v417
        %1725 = vmatprep.subr.mxu0 0.0
        %1726 = vmatpush1.msra.mxu0 %v420
        %1727 = vmatprep.subr.mxu0 0.0
        %1728 = vmatpush1.msra.mxu0 %v423
        %1729 = vmatprep.subr.mxu0 0.0
        %1730 = vmatpush1.msra.mxu0 %v426
        %1731 = vmatprep.subr.mxu0 0.0
        %1732 = vmatpush1.msra.mxu0 %v429
        %1733 = vmatprep.subr.mxu0 0.0
        %1734 = vmatpush1.msra.mxu0 %v432
        %1735 = vmatprep.subr.mxu0 0.0
        %1736 = vmatpush1.msra.mxu0 %v435
        %1737 = vmatprep.subr.mxu0 0.0
        %1738 = vmatpush1.msra.mxu0 %v438
        %1739 = vmatprep.subr.mxu0 0.0
        %1740 = vmatpush1.msra.mxu0 %v441
        %1741 = vmatprep.subr.mxu0 0.0
        %1742 = vmatpush1.msra.mxu0 %v444
        %1743 = vmatprep.subr.mxu0 0.0
        %1744 = vmatpush1.msra.mxu0 %v447
        %1745 = vmatprep.subr.mxu0 0.0
        %1746 = vmatpush1.msra.mxu0 %v450
        %1747 = vmatprep.subr.mxu0 0.0
        %1748 = vmatpush1.msra.mxu0 %v453
        %1749 = vmatprep.subr.mxu0 0.0
        %1750 = vmatpush1.msra.mxu0 %v456
        %1751 = vmatprep.subr.mxu0 0.0
        %1752 = vmatpush1.msra.mxu0 %v459
        %1753 = vmatprep.subr.mxu0 0.0
        %1754 = vmatpush1.msra.mxu0 %v462
        %1755 = vmatprep.subr.mxu0 0.0
        %1756 = vmatpush1.msra.mxu0 %v465
        %1757 = vmatprep.subr.mxu0 0.0
        %1758 = vmatpush1.msra.mxu0 %v468
        %1759 = vmatprep.subr.mxu0 0.0
        %1760 = vmatpush1.msra.mxu0 %v471
        %1761 = vmatprep.subr.mxu0 0.0
        %1762 = vmatpush1.msra.mxu0 %v474
        %1763 = vmatprep.subr.mxu0 0.0
        %1764 = vmatpush1.msra.mxu0 %v477
        %1765 = vmatprep.subr.mxu0 0.0
        %1766 = vmatpush1.msra.mxu0 %v480
        %1767 = vmatprep.subr.mxu0 0.0
        %1768 = vmatpush1.msra.mxu0 %v483
        %1769 = vmatprep.subr.mxu0 0.0
        %1770 = vmatpush1.msra.mxu0 %v486
        %1771 = vmatprep.subr.mxu0 0.0
        %1772 = vmatpush1.msra.mxu0 %v489
        %1773 = vmatprep.subr.mxu0 0.0
        %1774 = vmatpush1.msra.mxu0 %v492
        %1775 = vmatprep.subr.mxu0 0.0
        %1776 = vmatpush1.msra.mxu0 %v495
        %1777 = vmatprep.subr.mxu0 0.0
        %1778 = vmatpush1.msra.mxu0 %v498
        %1779 = vmatprep.subr.mxu0 0.0
        %1780 = vmatpush1.msra.mxu0 %v501
        %1781 = vmatprep.subr.mxu0 0.0
        %1782 = vmatpush1.msra.mxu0 %v504
        %1783 = vmatprep.mubr.f32.mxu0 %v300
        %1784 = vmatmul.mubr.f32.gmra.mrb[0].mxu0 %v299
        %v1785 = vpop.f32.mrb[0].mxu0
        %v1786 = vadd.f32 %v1716, %v1785
        %v1787 = vpop.f32.mrb[0].mxu0
        %1788 = vdwg.mxu0
        %1789 = vmatprep.subr.mxu0 0.0
        %1790 = vmatpush1.msra.mxu0 %v507
        %1791 = vmatprep.subr.mxu0 0.0
        %1792 = vmatpush1.msra.mxu0 %v510
        %1793 = vmatprep.subr.mxu0 0.0
        %1794 = vmatpush1.msra.mxu0 %v513
        %1795 = vmatprep.subr.mxu0 0.0
        %1796 = vmatpush1.msra.mxu0 %v516
        %1797 = vmatprep.subr.mxu0 0.0
        %1798 = vmatpush1.msra.mxu0 %v519
        %1799 = vmatprep.subr.mxu0 0.0
        %1800 = vmatpush1.msra.mxu0 %v522
        %1801 = vmatprep.subr.mxu0 0.0
        %1802 = vmatpush1.msra.mxu0 %v525
        %1803 = vmatprep.subr.mxu0 0.0
        %1804 = vmatpush1.msra.mxu0 %v528
        %1805 = vmatprep.subr.mxu0 0.0
        %1806 = vmatpush1.msra.mxu0 %v531
        %1807 = vmatprep.subr.mxu0 0.0
        %1808 = vmatpush1.msra.mxu0 %v534
        %1809 = vmatprep.subr.mxu0 0.0
        %1810 = vmatpush1.msra.mxu0 %v537
        %1811 = vmatprep.subr.mxu0 0.0
        %1812 = vmatpush1.msra.mxu0 %v540
        %1813 = vmatprep.subr.mxu0 0.0
        %1814 = vmatpush1.msra.mxu0 %v543
        %1815 = vmatprep.subr.mxu0 0.0
        %1816 = vmatpush1.msra.mxu0 %v546
        %1817 = vmatprep.subr.mxu0 0.0
        %1818 = vmatpush1.msra.mxu0 %v549
        %1819 = vmatprep.subr.mxu0 0.0
        %1820 = vmatpush1.msra.mxu0 %v552
        %1821 = vmatprep.subr.mxu0 0.0
        %1822 = vmatpush1.msra.mxu0 %v555
        %1823 = vmatprep.subr.mxu0 0.0
        %1824 = vmatpush1.msra.mxu0 %v558
        %1825 = vmatprep.subr.mxu0 0.0
        %1826 = vmatpush1.msra.mxu0 %v561
        %1827 = vmatprep.subr.mxu0 0.0
        %1828 = vmatpush1.msra.mxu0 %v564
        %1829 = vmatprep.subr.mxu0 0.0
        %1830 = vmatpush1.msra.mxu0 %v567
        %1831 = vmatprep.subr.mxu0 0.0
        %1832 = vmatpush1.msra.mxu0 %v570
        %1833 = vmatprep.subr.mxu0 0.0
        %1834 = vmatpush1.msra.mxu0 %v573
        %1835 = vmatprep.subr.mxu0 0.0
        %1836 = vmatpush1.msra.mxu0 %v576
        %1837 = vmatprep.subr.mxu0 0.0
        %1838 = vmatpush1.msra.mxu0 %v579
        %1839 = vmatprep.subr.mxu0 0.0
        %1840 = vmatpush1.msra.mxu0 %v582
        %1841 = vmatprep.subr.mxu0 0.0
        %1842 = vmatpush1.msra.mxu0 %v585
        %1843 = vmatprep.subr.mxu0 0.0
        %1844 = vmatpush1.msra.mxu0 %v588
        %1845 = vmatprep.subr.mxu0 0.0
        %1846 = vmatpush1.msra.mxu0 %v591
        %1847 = vmatprep.subr.mxu0 0.0
        %1848 = vmatpush1.msra.mxu0 %v594
        %1849 = vmatprep.subr.mxu0 0.0
        %1850 = vmatpush1.msra.mxu0 %v597
        %1851 = vmatprep.subr.mxu0 0.0
        %1852 = vmatpush1.msra.mxu0 %v600
        %1853 = vmatprep.mubr.f32.mxu0 %v302
        %1854 = vmatmul.mubr.f32.gmra.mrb[0].mxu0 %v301
        %v1855 = vpop.f32.mrb[0].mxu0
        %v1856 = vadd.f32 %v1786, %v1855
        %v1857 = vpop.f32.mrb[0].mxu0
        %1858 = vdwg.mxu0
        %1859 = vmatprep.subr.mxu0 0.0
        %1860 = vmatpush1.msra.mxu0 %v603
        %1861 = vmatprep.subr.mxu0 0.0
        %1862 = vmatpush1.msra.mxu0 %v606
        %1863 = vmatprep.subr.mxu0 0.0
        %1864 = vmatpush1.msra.mxu0 %v609
        %1865 = vmatprep.subr.mxu0 0.0
        %1866 = vmatpush1.msra.mxu0 %v612
        %1867 = vmatprep.subr.mxu0 0.0
        %1868 = vmatpush1.msra.mxu0 %v615
        %1869 = vmatprep.subr.mxu0 0.0
        %1870 = vmatpush1.msra.mxu0 %v618
        %1871 = vmatprep.subr.mxu0 0.0
        %1872 = vmatpush1.msra.mxu0 %v621
        %1873 = vmatprep.subr.mxu0 0.0
        %1874 = vmatpush1.msra.mxu0 %v624
        %1875 = vmatprep.subr.mxu0 0.0
        %1876 = vmatpush1.msra.mxu0 %v627
        %1877 = vmatprep.subr.mxu0 0.0
        %1878 = vmatpush1.msra.mxu0 %v630
        %1879 = vmatprep.subr.mxu0 0.0
        %1880 = vmatpush1.msra.mxu0 %v633
        %1881 = vmatprep.subr.mxu0 0.0
        %1882 = vmatpush1.msra.mxu0 %v636
        %1883 = vmatprep.subr.mxu0 0.0
        %1884 = vmatpush1.msra.mxu0 %v639
        %1885 = vmatprep.subr.mxu0 0.0
        %1886 = vmatpush1.msra.mxu0 %v642
        %1887 = vmatprep.subr.mxu0 0.0
        %1888 = vmatpush1.msra.mxu0 %v645
        %1889 = vmatprep.subr.mxu0 0.0
        %1890 = vmatpush1.msra.mxu0 %v648
        %1891 = vmatprep.subr.mxu0 0.0
        %1892 = vmatpush1.msra.mxu0 %v651
        %1893 = vmatprep.subr.mxu0 0.0
        %1894 = vmatpush1.msra.mxu0 %v654
        %1895 = vmatprep.subr.mxu0 0.0
        %1896 = vmatpush1.msra.mxu0 %v657
        %1897 = vmatprep.subr.mxu0 0.0
        %1898 = vmatpush1.msra.mxu0 %v660
        %1899 = vmatprep.subr.mxu0 0.0
        %1900 = vmatpush1.msra.mxu0 %v663
        %1901 = vmatprep.subr.mxu0 0.0
        %1902 = vmatpush1.msra.mxu0 %v666
        %1903 = vmatprep.subr.mxu0 0.0
        %1904 = vmatpush1.msra.mxu0 %v669
        %1905 = vmatprep.subr.mxu0 0.0
        %1906 = vmatpush1.msra.mxu0 %v672
        %1907 = vmatprep.subr.mxu0 0.0
        %1908 = vmatpush1.msra.mxu0 %v675
        %1909 = vmatprep.subr.mxu0 0.0
        %1910 = vmatpush1.msra.mxu0 %v678
        %1911 = vmatprep.subr.mxu0 0.0
        %1912 = vmatpush1.msra.mxu0 %v681
        %1913 = vmatprep.subr.mxu0 0.0
        %1914 = vmatpush1.msra.mxu0 %v684
        %1915 = vmatprep.subr.mxu0 0.0
        %1916 = vmatpush1.msra.mxu0 %v687
        %1917 = vmatprep.subr.mxu0 0.0
        %1918 = vmatpush1.msra.mxu0 %v690
        %1919 = vmatprep.subr.mxu0 0.0
        %1920 = vmatpush1.msra.mxu0 %v693
        %1921 = vmatprep.subr.mxu0 0.0
        %1922 = vmatpush1.msra.mxu0 %v696
        %1923 = vmatprep.mubr.f32.mxu0 %v304
        %1924 = vmatmul.mubr.f32.gmra.mrb[0].mxu0 %v303
        %v1925 = vpop.f32.mrb[0].mxu0
        %v1926 = vadd.f32 %v1856, %v1925
        %v1927 = vpop.f32.mrb[0].mxu0
        %1928 = vdwg.mxu0
        %1929 = vmatprep.subr.mxu0 0.0
        %1930 = vmatpush1.msra.mxu0 %v699
        %1931 = vmatprep.subr.mxu0 0.0
        %1932 = vmatpush1.msra.mxu0 %v702
        %1933 = vmatprep.subr.mxu0 0.0
        %1934 = vmatpush1.msra.mxu0 %v705
        %1935 = vmatprep.subr.mxu0 0.0
        %1936 = vmatpush1.msra.mxu0 %v708
        %1937 = vmatprep.subr.mxu0 0.0
        %1938 = vmatpush1.msra.mxu0 %v711
        %1939 = vmatprep.subr.mxu0 0.0
        %1940 = vmatpush1.msra.mxu0 %v714
        %1941 = vmatprep.subr.mxu0 0.0
        %1942 = vmatpush1.msra.mxu0 %v717
        %1943 = vmatprep.subr.mxu0 0.0
        %1944 = vmatpush1.msra.mxu0 %v720
        %1945 = vmatprep.subr.mxu0 0.0
        %1946 = vmatpush1.msra.mxu0 %v723
        %1947 = vmatprep.subr.mxu0 0.0
        %1948 = vmatpush1.msra.mxu0 %v726
        %1949 = vmatprep.subr.mxu0 0.0
        %1950 = vmatpush1.msra.mxu0 %v729
        %1951 = vmatprep.subr.mxu0 0.0
        %1952 = vmatpush1.msra.mxu0 %v732
        %1953 = vmatprep.subr.mxu0 0.0
        %1954 = vmatpush1.msra.mxu0 %v735
        %1955 = vmatprep.subr.mxu0 0.0
        %1956 = vmatpush1.msra.mxu0 %v738
        %1957 = vmatprep.subr.mxu0 0.0
        %1958 = vmatpush1.msra.mxu0 %v741
        %1959 = vmatprep.subr.mxu0 0.0
        %1960 = vmatpush1.msra.mxu0 %v744
        %1961 = vmatprep.subr.mxu0 0.0
        %1962 = vmatpush1.msra.mxu0 %v747
        %1963 = vmatprep.subr.mxu0 0.0
        %1964 = vmatpush1.msra.mxu0 %v750
        %1965 = vmatprep.subr.mxu0 0.0
        %1966 = vmatpush1.msra.mxu0 %v753
        %1967 = vmatprep.subr.mxu0 0.0
        %1968 = vmatpush1.msra.mxu0 %v756
        %1969 = vmatprep.subr.mxu0 0.0
        %1970 = vmatpush1.msra.mxu0 %v759
        %1971 = vmatprep.subr.mxu0 0.0
        %1972 = vmatpush1.msra.mxu0 %v762
        %1973 = vmatprep.subr.mxu0 0.0
        %1974 = vmatpush1.msra.mxu0 %v765
        %1975 = vmatprep.subr.mxu0 0.0
        %1976 = vmatpush1.msra.mxu0 %v768
        %1977 = vmatprep.subr.mxu0 0.0
        %1978 = vmatpush1.msra.mxu0 %v771
        %1979 = vmatprep.subr.mxu0 0.0
        %1980 = vmatpush1.msra.mxu0 %v774
        %1981 = vmatprep.subr.mxu0 0.0
        %1982 = vmatpush1.msra.mxu0 %v777
        %1983 = vmatprep.subr.mxu0 0.0
        %1984 = vmatpush1.msra.mxu0 %v780
        %1985 = vmatprep.subr.mxu0 0.0
        %1986 = vmatpush1.msra.mxu0 %v783
        %1987 = vmatprep.subr.mxu0 0.0
        %1988 = vmatpush1.msra.mxu0 %v786
        %1989 = vmatprep.subr.mxu0 0.0
        %1990 = vmatpush1.msra.mxu0 %v789
        %1991 = vmatprep.subr.mxu0 0.0
        %1992 = vmatpush1.msra.mxu0 %v792
        %1993 = vmatprep.mubr.f32.mxu0 %v306
        %1994 = vmatmul.mubr.f32.gmra.mrb[0].mxu0 %v305
        %v1995 = vpop.f32.mrb[0].mxu0
        %v1996 = vadd.f32 %v1926, %v1995
        %v1997 = vpop.f32.mrb[0].mxu0
        %1998 = vdwg.mxu0
        %1999 = vmatprep.subr.mxu0 0.0
        %2000 = vmatpush1.msra.mxu0 %v795
        %2001 = vmatprep.subr.mxu0 0.0
        %2002 = vmatpush1.msra.mxu0 %v798
        %2003 = vmatprep.subr.mxu0 0.0
        %2004 = vmatpush1.msra.mxu0 %v801
        %2005 = vmatprep.subr.mxu0 0.0
        %2006 = vmatpush1.msra.mxu0 %v804
        %2007 = vmatprep.subr.mxu0 0.0
        %2008 = vmatpush1.msra.mxu0 %v807
        %2009 = vmatprep.subr.mxu0 0.0
        %2010 = vmatpush1.msra.mxu0 %v810
        %2011 = vmatprep.subr.mxu0 0.0
        %2012 = vmatpush1.msra.mxu0 %v813
        %2013 = vmatprep.subr.mxu0 0.0
        %2014 = vmatpush1.msra.mxu0 %v816
        %2015 = vmatprep.subr.mxu0 0.0
        %2016 = vmatpush1.msra.mxu0 %v819
        %2017 = vmatprep.subr.mxu0 0.0
        %2018 = vmatpush1.msra.mxu0 %v822
        %2019 = vmatprep.subr.mxu0 0.0
        %2020 = vmatpush1.msra.mxu0 %v825
        %2021 = vmatprep.subr.mxu0 0.0
        %2022 = vmatpush1.msra.mxu0 %v828
        %2023 = vmatprep.subr.mxu0 0.0
        %2024 = vmatpush1.msra.mxu0 %v831
        %2025 = vmatprep.subr.mxu0 0.0
        %2026 = vmatpush1.msra.mxu0 %v834
        %2027 = vmatprep.subr.mxu0 0.0
        %2028 = vmatpush1.msra.mxu0 %v837
        %2029 = vmatprep.subr.mxu0 0.0
        %2030 = vmatpush1.msra.mxu0 %v840
        %2031 = vmatprep.subr.mxu0 0.0
        %2032 = vmatpush1.msra.mxu0 %v843
        %2033 = vmatprep.subr.mxu0 0.0
        %2034 = vmatpush1.msra.mxu0 %v846
        %2035 = vmatprep.subr.mxu0 0.0
        %2036 = vmatpush1.msra.mxu0 %v849
        %2037 = vmatprep.subr.mxu0 0.0
        %2038 = vmatpush1.msra.mxu0 %v852
        %2039 = vmatprep.subr.mxu0 0.0
        %2040 = vmatpush1.msra.mxu0 %v855
        %2041 = vmatprep.subr.mxu0 0.0
        %2042 = vmatpush1.msra.mxu0 %v858
        %2043 = vmatprep.subr.mxu0 0.0
        %2044 = vmatpush1.msra.mxu0 %v861
        %2045 = vmatprep.subr.mxu0 0.0
        %2046 = vmatpush1.msra.mxu0 %v864
        %2047 = vmatprep.subr.mxu0 0.0
        %2048 = vmatpush1.msra.mxu0 %v867
        %2049 = vmatprep.subr.mxu0 0.0
        %2050 = vmatpush1.msra.mxu0 %v870
        %2051 = vmatprep.subr.mxu0 0.0
        %2052 = vmatpush1.msra.mxu0 %v873
        %2053 = vmatprep.subr.mxu0 0.0
        %2054 = vmatpush1.msra.mxu0 %v876
        %2055 = vmatprep.subr.mxu0 0.0
        %2056 = vmatpush1.msra.mxu0 %v879
        %2057 = vmatprep.subr.mxu0 0.0
        %2058 = vmatpush1.msra.mxu0 %v882
        %2059 = vmatprep.subr.mxu0 0.0
        %2060 = vmatpush1.msra.mxu0 %v885
        %2061 = vmatprep.subr.mxu0 0.0
        %2062 = vmatpush1.msra.mxu0 %v888
        %2063 = vmatprep.mubr.f32.mxu0 %v308
        %2064 = vmatmul.mubr.f32.gmra.mrb[0].mxu0 %v307
        %v2065 = vpop.f32.mrb[0].mxu0
        %v2066 = vadd.f32 %v1996, %v2065
        %v2067 = vpop.f32.mrb[0].mxu0
        %2068 = vdwg.mxu0
        %2069 = vmatprep.subr.mxu0 0.0
        %2070 = vmatpush1.msra.mxu0 %v891
        %2071 = vmatprep.subr.mxu0 0.0
        %2072 = vmatpush1.msra.mxu0 %v894
        %2073 = vmatprep.subr.mxu0 0.0
        %2074 = vmatpush1.msra.mxu0 %v897
        %2075 = vmatprep.subr.mxu0 0.0
        %2076 = vmatpush1.msra.mxu0 %v900
        %2077 = vmatprep.subr.mxu0 0.0
        %2078 = vmatpush1.msra.mxu0 %v903
        %2079 = vmatprep.subr.mxu0 0.0
        %2080 = vmatpush1.msra.mxu0 %v906
        %2081 = vmatprep.subr.mxu0 0.0
        %2082 = vmatpush1.msra.mxu0 %v909
        %2083 = vmatprep.subr.mxu0 0.0
        %2084 = vmatpush1.msra.mxu0 %v912
        %2085 = vmatprep.subr.mxu0 0.0
        %2086 = vmatpush1.msra.mxu0 %v915
        %2087 = vmatprep.subr.mxu0 0.0
        %2088 = vmatpush1.msra.mxu0 %v918
        %2089 = vmatprep.subr.mxu0 0.0
        %2090 = vmatpush1.msra.mxu0 %v921
        %2091 = vmatprep.subr.mxu0 0.0
        %2092 = vmatpush1.msra.mxu0 %v924
        %2093 = vmatprep.subr.mxu0 0.0
        %2094 = vmatpush1.msra.mxu0 %v927
        %2095 = vmatprep.subr.mxu0 0.0
        %2096 = vmatpush1.msra.mxu0 %v930
        %2097 = vmatprep.subr.mxu0 0.0
        %2098 = vmatpush1.msra.mxu0 %v933
        %2099 = vmatprep.subr.mxu0 0.0
        %2100 = vmatpush1.msra.mxu0 %v936
        %2101 = vmatprep.subr.mxu0 0.0
        %2102 = vmatpush1.msra.mxu0 %v939
        %2103 = vmatprep.subr.mxu0 0.0
        %2104 = vmatpush1.msra.mxu0 %v942
        %2105 = vmatprep.subr.mxu0 0.0
        %2106 = vmatpush1.msra.mxu0 %v945
        %2107 = vmatprep.subr.mxu0 0.0
        %2108 = vmatpush1.msra.mxu0 %v948
        %2109 = vmatprep.subr.mxu0 0.0
        %2110 = vmatpush1.msra.mxu0 %v951
        %2111 = vmatprep.subr.mxu0 0.0
        %2112 = vmatpush1.msra.mxu0 %v954
        %2113 = vmatprep.subr.mxu0 0.0
        %2114 = vmatpush1.msra.mxu0 %v957
        %2115 = vmatprep.subr.mxu0 0.0
        %2116 = vmatpush1.msra.mxu0 %v960
        %2117 = vmatprep.subr.mxu0 0.0
        %2118 = vmatpush1.msra.mxu0 %v963
        %2119 = vmatprep.subr.mxu0 0.0
        %2120 = vmatpush1.msra.mxu0 %v966
        %2121 = vmatprep.subr.mxu0 0.0
        %2122 = vmatpush1.msra.mxu0 %v969
        %2123 = vmatprep.subr.mxu0 0.0
        %2124 = vmatpush1.msra.mxu0 %v972
        %2125 = vmatprep.subr.mxu0 0.0
        %2126 = vmatpush1.msra.mxu0 %v975
        %2127 = vmatprep.subr.mxu0 0.0
        %2128 = vmatpush1.msra.mxu0 %v978
        %2129 = vmatprep.subr.mxu0 0.0
        %2130 = vmatpush1.msra.mxu0 %v981
        %2131 = vmatprep.subr.mxu0 0.0
        %2132 = vmatpush1.msra.mxu0 %v984
        %2133 = vmatprep.mubr.f32.mxu0 %v310
        %2134 = vmatmul.mubr.f32.gmra.mrb[0].mxu0 %v309
        %v2135 = vpop.f32.mrb[0].mxu0
        %v2136 = vadd.f32 %v2066, %v2135
        %v2137 = vpop.f32.mrb[0].mxu0
        %2138 = vdwg.mxu0
        %2139 = vmatprep.subr.mxu0 0.0
        %2140 = vmatpush1.msra.mxu0 %v987
        %2141 = vmatprep.subr.mxu0 0.0
        %2142 = vmatpush1.msra.mxu0 %v990
        %2143 = vmatprep.subr.mxu0 0.0
        %2144 = vmatpush1.msra.mxu0 %v993
        %2145 = vmatprep.subr.mxu0 0.0
        %2146 = vmatpush1.msra.mxu0 %v996
        %2147 = vmatprep.subr.mxu0 0.0
        %2148 = vmatpush1.msra.mxu0 %v999
        %2149 = vmatprep.subr.mxu0 0.0
        %2150 = vmatpush1.msra.mxu0 %v1002
        %2151 = vmatprep.subr.mxu0 0.0
        %2152 = vmatpush1.msra.mxu0 %v1005
        %2153 = vmatprep.subr.mxu0 0.0
        %2154 = vmatpush1.msra.mxu0 %v1008
        %2155 = vmatprep.subr.mxu0 0.0
        %2156 = vmatpush1.msra.mxu0 %v1011
        %2157 = vmatprep.subr.mxu0 0.0
        %2158 = vmatpush1.msra.mxu0 %v1014
        %2159 = vmatprep.subr.mxu0 0.0
        %2160 = vmatpush1.msra.mxu0 %v1017
        %2161 = vmatprep.subr.mxu0 0.0
        %2162 = vmatpush1.msra.mxu0 %v1020
        %2163 = vmatprep.subr.mxu0 0.0
        %2164 = vmatpush1.msra.mxu0 %v1023
        %2165 = vmatprep.subr.mxu0 0.0
        %2166 = vmatpush1.msra.mxu0 %v1026
        %2167 = vmatprep.subr.mxu0 0.0
        %2168 = vmatpush1.msra.mxu0 %v1029
        %2169 = vmatprep.subr.mxu0 0.0
        %2170 = vmatpush1.msra.mxu0 %v1032
        %2171 = vmatprep.subr.mxu0 0.0
        %2172 = vmatpush1.msra.mxu0 %v1035
        %2173 = vmatprep.subr.mxu0 0.0
        %2174 = vmatpush1.msra.mxu0 %v1038
        %2175 = vmatprep.subr.mxu0 0.0
        %2176 = vmatpush1.msra.mxu0 %v1041
        %2177 = vmatprep.subr.mxu0 0.0
        %2178 = vmatpush1.msra.mxu0 %v1044
        %2179 = vmatprep.subr.mxu0 0.0
        %2180 = vmatpush1.msra.mxu0 %v1047
        %2181 = vmatprep.subr.mxu0 0.0
        %2182 = vmatpush1.msra.mxu0 %v1050
        %2183 = vmatprep.subr.mxu0 0.0
        %2184 = vmatpush1.msra.mxu0 %v1053
        %2185 = vmatprep.subr.mxu0 0.0
        %2186 = vmatpush1.msra.mxu0 %v1056
        %2187 = vmatprep.subr.mxu0 0.0
        %2188 = vmatpush1.msra.mxu0 %v1059
        %2189 = vmatprep.subr.mxu0 0.0
        %2190 = vmatpush1.msra.mxu0 %v1062
        %2191 = vmatprep.subr.mxu0 0.0
        %2192 = vmatpush1.msra.mxu0 %v1065
        %2193 = vmatprep.subr.mxu0 0.0
        %2194 = vmatpush1.msra.mxu0 %v1068
        %2195 = vmatprep.subr.mxu0 0.0
        %2196 = vmatpush1.msra.mxu0 %v1071
        %2197 = vmatprep.subr.mxu0 0.0
        %2198 = vmatpush1.msra.mxu0 %v1074
        %2199 = vmatprep.subr.mxu0 0.0
        %2200 = vmatpush1.msra.mxu0 %v1077
        %2201 = vmatprep.subr.mxu0 0.0
        %2202 = vmatpush1.msra.mxu0 %v1080
        %2203 = vmatprep.mubr.f32.mxu0 %v312
        %2204 = vmatmul.mubr.f32.gmra.mrb[0].mxu0 %v311
        %v2205 = vpop.f32.mrb[0].mxu0
        %v2206 = vadd.f32 %v2136, %v2205
        %v2207 = vpop.f32.mrb[0].mxu0
        %2208 = vdwg.mxu0
        %v2209 = vadd.f32 %v294, %v1645
        %v2210 = vadd.f32 %v295, %v1647
        %v2211 = vadd.f32 %v296, %v2206
        %2212 = vst [vmem:[%s259] sm:$0xff] %v2209
        %2213 = vst [vmem:[%s259 + $0x8] sm:$0xff] %v2210
        %2214 = vst [vmem:[%s259 + $0x10] sm:$0xff] %v2211
        %s2215 = sand.u32 %s123, 1
        %s2216 = scalar_lea.sflag [#allocation4], %s2215
        %s2217 = sand.u32 %s123, 1
        %s2218 = smul.addr %s2217, 24
        %s2219 = scalar_lea.vmem [#allocation7], %s2218
        // Predicated region
        $region45: #{pallas_linear.1} parent=31 // pred_check
          %p2220 = pneg %p133
        $region46: #{pallas_linear.1} parent=31 // pred_check_branch
          %2222 = sbr.rel (%p2220) target = $region48
        $region47: #{pallas_linear.1} parent=31 // pred_region
          %s2223 = smul.u32 3, %s27
          %s2225 = ssub.s32 384, 384
          %2226 = vsyncadd %s2216, %s2225
          %s2227 = smul.addr %s2223, 128
          %s2228 = scalar_lea.hbm %s3, %s2227
          %s2230 = sshll.u32 %s2219, 4
          %s2231 = int_to_ptr.vmem [resolvable:$true] %s2230
          %2233 = dma.vmem_to_hbm [thread:$0]  %s2231, 384, %s2228, %s2216
        $region48: #{pallas_linear.1} parent=31 // pred_fallthru
          _
      $region32: #{pallas_linear.1} parent=5 // pred_fallthru
        _
      %p2234 = scmp.le.s32.totalorder 2, %s18
      // Predicated region
      $region49: #{pallas_linear.1} parent=5 // pred_check
        %p2235 = pneg %p2234
      $region50: #{pallas_linear.1} parent=5 // pred_check_branch
        %2237 = sbr.rel (%p2235) target = $region52
      $region51: #{pallas_linear.1} parent=5 // pred_region
        %s2238 = ssub.s32 %s18, 2
        // Predicated region
        $region53: #{pallas_linear.1} parent=51 // pred_check
          %p2239 = pneg %p139
        $region54: #{pallas_linear.1} parent=51 // pred_check_branch
          %2241 = sbr.rel (%p2239) target = $region56
        $region55: #{pallas_linear.1} parent=51 // pred_region
          %s2242 = sand.u32 %s124, 1
          %s2243 = scalar_lea.sflag [#allocation4], %s2242
          %s2244 = sand.u32 %s124, 1
          %s2245 = smul.addr %s2244, 24
          %s2246 = scalar_lea.vmem [#allocation7], %s2245
          %2247 = dma.done %s2243, 384
        $region56: #{pallas_linear.1} parent=51 // pred_fallthru
          _
      $region52: #{pallas_linear.1} parent=5 // pred_fallthru
        _
    $region6: #{pallas_linear.1} parent=1 // loop_footer
      %s22 = sadd.s32 1, %s18
    $region7: #{pallas_linear.1} parent=1 // loop_footer_branch
      %17 = sbr.rel target = $region3
    $region8: #{pallas_linear.1} parent=1 // loop_exit
      _
    %2248 = vsyncpa [#allocation3], 1
    %s2249 = scalar_lea.sflag [#allocation3], 1
    %2250 = vsyncpa %s2249, 1
    %2251 = vsyncpa [#allocation6], 1
    %s2252 = scalar_lea.sflag [#allocation6], 1
    %2253 = vsyncpa %s2252, 1
    %2254 = vsyncpa [#allocation4], 1
    %s2255 = scalar_lea.sflag [#allocation4], 1
    %2256 = vsyncpa %s2255, 1

</llo_original>
